<compile_context>
chip_gen: v7x
topology: tpu7x:2x2x1
jax: 0.10.0
libtpu: 0.0.40
codegen_flags: <defaults>
</compile_context>

<pallas_src>
import jax
import jax.numpy as jnp
from jax.experimental import pallas as pl
from jax.experimental.pallas import tpu as pltpu  # noqa: F401  (see TODOs above)


# --------------------------------------------------------------------------------------
# Fused kernel: num_layers tanh-RNN layers (wavefront) + fc, all in VMEM, no grid.
# --------------------------------------------------------------------------------------
def _make_fused_kernel(num_layers, seq_len, batch_pad):
    T, Bp = seq_len, batch_pad

    def kernel(x_ref, *refs):
        # refs = (wih0, whh0, b0, ..., wih{L-1}, whh{L-1}, b{L-1}, fc_w, fc_b, out_ref)
        out_ref = refs[-1]
        fc_w = refs[-3][...]          # (H, O_pad)
        fc_b = refs[-2][...]          # (1, O_pad)
        layer_refs = refs[:-3]

        # Resident weight loads, hoisted once (outside all loops).
        wih = [layer_refs[3 * l][...] for l in range(num_layers)]        # (d_in, H)
        whh = [layer_refs[3 * l + 1][...] for l in range(num_layers)]    # (H, H)
        bias = [layer_refs[3 * l + 2][...] for l in range(num_layers)]   # (1, H)
        H = whh[0].shape[0]

        # Hoisted layer-0 input projection: ONE batched (T*Bp, D) @ (D, H) GEMM for all
        # timesteps, fused bias added once.  x_ref is already time-major and batch
        # padded to 8 sublanes (wrapper layout prep) -> zero in-kernel relayout and
        # every per-step slice below starts on an 8-sublane boundary.
        pre0 = jnp.dot(x_ref[...], wih[0], preferred_element_type=jnp.float32) + bias[0]

        # Skewed wavefront: at wave w, layer l works on timestep t = w - l.
        #   h[l] at the start of wave w holds layer l's output at time (w-1) - l,
        #   so layer l's two operands (h[l-1] -> same-time input, h[l] -> previous
        #   time recurrence) are both last-wave values; the per-wave layer chains are
        #   independent and overlap on MXU/VPU/EUP.
        # T=8, num_layers=2 -> 9 fully-unrolled waves (static Python loop).
        # TODO(synk): switch to lax.fori_loop(..., unroll=k) over T-chunks for long T.
        h = [jnp.zeros((Bp, H), jnp.float32) for _ in range(num_layers)]  # PyTorch h0=0
        for w in range(T + num_layers - 1):
            new_h = list(h)
            for l in range(num_layers):
                t = w - l
                if 0 <= t < T:
                    if l == 0:
                        inp = pre0[t * Bp:(t + 1) * Bp, :]        # static, 8-aligned
                    else:
                        # h[l-1] currently holds layer l-1's output at time t.
                        inp = (jnp.dot(h[l - 1], wih[l],
                                       preferred_element_type=jnp.float32) + bias[l])
                    new_h[l] = jnp.tanh(
                        inp + jnp.dot(h[l], whh[l],
                                      preferred_element_type=jnp.float32))
            h = new_h

        # fc on the top layer's final hidden state only; lane-dense (8, 128) store.
        out = jnp.dot(h[-1], fc_w, preferred_element_type=jnp.float32) + fc_b
        out_ref[...] = out.astype(out_ref.dtype)

    return kernel


# --------------------------------------------------------------------------------------
# Wrapper
# --------------------------------------------------------------------------------------
def _rnn_forward_impl(x_btd, params, *, output_size):
    """x_btd: (B, T, input_size) -> (B, output_size)."""
    B, T, D = x_btd.shape
    Bp = ((B + 7) // 8) * 8  # pad batch to the 8-sublane tile

    layers = params["layers"]
    num_layers = len(layers)

    # Wrapper-side layout prep (one cheap XLA transpose/pad/reshape):
    # time-major, batch padded with zero rows, flattened to a contiguous GEMM operand.
    x_tm = jnp.transpose(x_btd, (1, 0, 2))                  # (T, B, D)
    x_tm = jnp.pad(x_tm, ((0, 0), (0, Bp - B), (0, 0)))     # (T, Bp, D)
    x_tm = x_tm.reshape(T * Bp, D)                          # (T*Bp, D)

    flat = []
    for (wih_t, whh_t, bias) in layers:
        flat += [wih_t, whh_t, bias]
    flat += [params["fc_w_pad"], params["fc_b_pad"]]
    pad_o = params["fc_w_pad"].shape[1]

    out_padded = pl.pallas_call(
        _make_fused_kernel(num_layers, T, Bp),
        out_shape=jax.ShapeDtypeStruct((Bp, pad_o), jnp.float32),
        # No grid: every operand is the full array (VMEM-resident for the whole
        # kernel); padded batch rows carry tanh(bias) garbage but are sliced off here.
    )(x_tm, *flat)

    return out_padded[:B, :output_size]


rnn_forward = jax.jit(_rnn_forward_impl, static_argnames=("output_size",))


# --------------------------------------------------------------------------------------
# Deterministic parameter init (PyTorch-style U(-1/sqrt(H), 1/sqrt(H)))
# --------------------------------------------------------------------------------------
def init_params(key, input_size, hidden_size, num_layers, output_size):
    k = float(hidden_size) ** -0.5
    layers = []
    for l in range(num_layers):
        d_in = input_size if l == 0 else hidden_size
        key, k1, k2, k3, k4 = jax.random.split(key, 5)
        w_ih = jax.random.uniform(k1, (hidden_size, d_in), jnp.float32, -k, k)
        w_hh = jax.random.uniform(k2, (hidden_size, hidden_size), jnp.float32, -k, k)
        b_ih = jax.random.uniform(k3, (hidden_size,), jnp.float32, -k, k)
        b_hh = jax.random.uniform(k4, (hidden_size,), jnp.float32, -k, k)
        # kernel-friendly storage: transposed weights + fused bias as (1, H)
        layers.append((w_ih.T, w_hh.T, (b_ih + b_hh).reshape(1, hidden_size)))

    key, k5, k6 = jax.random.split(key, 3)
    fc_w = jax.random.uniform(k5, (output_size, hidden_size), jnp.float32, -k, k)
    fc_b = jax.random.uniform(k6, (output_size,), jnp.float32, -k, k)

    # Lane-pad the fc weight/bias once at init so the kernel's output store is
    # lane-dense (128-multiple last dim); wrapper slices back to output_size.
    pad_o = ((output_size + 127) // 128) * 128
    fc_w_pad = jnp.zeros((hidden_size, pad_o), jnp.float32).at[:, :output_size].set(fc_w.T)
    fc_b_pad = jnp.zeros((1, pad_o), jnp.float32).at[0, :output_size].set(fc_b)

    return {"layers": layers, "fc_w_pad": fc_w_pad, "fc_b_pad": fc_b_pad}


# --------------------------------------------------------------------------------------
# Pure-JAX reference (correctness check)
# --------------------------------------------------------------------------------------
def rnn_forward_ref(x_btd, params, output_size):
    h_seq = jnp.transpose(x_btd, (1, 0, 2))  # (T, B, D)
    B = h_seq.shape[1]
    for (wih_t, whh_t, bias) in params["layers"]:
        H = whh_t.shape[0]
        h = jnp.zeros((B, H), jnp.float32)
        outs = []
        for t in range(h_seq.shape[0]):
            h = jnp.tanh(h_seq[t] @ wih_t + h @ whh_t + bias)
            outs.append(h)
        h_seq = jnp.stack(outs, axis=0)
    w = params["fc_w_pad"][:, :output_size]
    b = params["fc_b_pad"][0, :output_size]
    return h_seq[-1] @ w + b


# --------------------------------------------------------------------------------------
if __name__ == "__main__":
    batch, seq_len = 2, 8
    input_size, hidden_size, num_layers, output_size = 16, 32, 2, 4

    key = jax.random.PRNGKey(0)
    key, kx = jax.random.split(key)
    x = jax.random.normal(kx, (batch, seq_len, input_size), jnp.float32)

    params = init_params(key, input_size, hidden_size, num_layers, output_size)

    out = rnn_forward(x, params, output_size=output_size)
    out = jax.block_until_ready(out)

    ref = rnn_forward_ref(x, params, output_size)
    assert out.shape == (batch, output_size)
    assert jnp.allclose(out, ref, atol=1e-5, rtol=1e-5), "mismatch vs JAX reference"

    print("KERNEL_OK")
</pallas_src>

<mosaic_0001>
module attributes {stable_mosaic.version = 11 : i64} {
  func.func @kernel(%arg0: memref<64x16xf32, #tpu.memory_space<vmem>>, %arg1: memref<16x32xf32, #tpu.memory_space<vmem>>, %arg2: memref<32x32xf32, #tpu.memory_space<vmem>>, %arg3: memref<1x32xf32, #tpu.memory_space<vmem>>, %arg4: memref<32x32xf32, #tpu.memory_space<vmem>>, %arg5: memref<32x32xf32, #tpu.memory_space<vmem>>, %arg6: memref<1x32xf32, #tpu.memory_space<vmem>>, %arg7: memref<32x128xf32, #tpu.memory_space<vmem>>, %arg8: memref<1x128xf32, #tpu.memory_space<vmem>>, %arg9: memref<8x128xf32, #tpu.memory_space<vmem>>) attributes {dimension_semantics = [], scalar_prefetch = 0 : i64, scratch_operands = 0 : i64, tpu.core_type = #tpu.core_type<tc>} {
    %c0 = arith.constant 0 : index
    %c0_0 = arith.constant 0 : index
    %0 = vector.load %arg7[%c0, %c0_0] : memref<32x128xf32, #tpu.memory_space<vmem>>, vector<32x128xf32>
    %c0_1 = arith.constant 0 : index
    %c0_2 = arith.constant 0 : index
    %1 = vector.load %arg8[%c0_1, %c0_2] : memref<1x128xf32, #tpu.memory_space<vmem>>, vector<1x128xf32>
    %c0_3 = arith.constant 0 : index
    %c0_4 = arith.constant 0 : index
    %2 = vector.load %arg1[%c0_3, %c0_4] : memref<16x32xf32, #tpu.memory_space<vmem>>, vector<16x32xf32>
    %c0_5 = arith.constant 0 : index
    %c0_6 = arith.constant 0 : index
    %3 = vector.load %arg4[%c0_5, %c0_6] : memref<32x32xf32, #tpu.memory_space<vmem>>, vector<32x32xf32>
    %c0_7 = arith.constant 0 : index
    %c0_8 = arith.constant 0 : index
    %4 = vector.load %arg2[%c0_7, %c0_8] : memref<32x32xf32, #tpu.memory_space<vmem>>, vector<32x32xf32>
    %c0_9 = arith.constant 0 : index
    %c0_10 = arith.constant 0 : index
    %5 = vector.load %arg5[%c0_9, %c0_10] : memref<32x32xf32, #tpu.memory_space<vmem>>, vector<32x32xf32>
    %c0_11 = arith.constant 0 : index
    %c0_12 = arith.constant 0 : index
    %6 = vector.load %arg3[%c0_11, %c0_12] : memref<1x32xf32, #tpu.memory_space<vmem>>, vector<1x32xf32>
    %c0_13 = arith.constant 0 : index
    %c0_14 = arith.constant 0 : index
    %7 = vector.load %arg6[%c0_13, %c0_14] : memref<1x32xf32, #tpu.memory_space<vmem>>, vector<1x32xf32>
    %c0_15 = arith.constant 0 : index
    %c0_16 = arith.constant 0 : index
    %8 = vector.load %arg0[%c0_15, %c0_16] : memref<64x16xf32, #tpu.memory_space<vmem>>, vector<64x16xf32>
    %cst = arith.constant dense<0.000000e+00> : vector<64x32xf32>
    %9 = tpu.matmul %8, %2, %cst {dimension_numbers = #tpu.dot_dimension_numbers<[1], [0], [0], [1], [0, 0, 1, 1], [], []>} : vector<64x16xf32>, vector<16x32xf32>, vector<64x32xf32> -> vector<64x32xf32>
    %10 = vector.broadcast %6 : vector<1x32xf32> to vector<64x32xf32>
    %11 = arith.addf %9, %10 : vector<64x32xf32>
    %cst_17 = arith.constant 0.000000e+00 : f32
    %12 = vector.broadcast %cst_17 : f32 to vector<8x32xf32>
    %cst_18 = arith.constant 0.000000e+00 : f32
    %13 = vector.broadcast %cst_18 : f32 to vector<8x32xf32>
    %14 = vector.extract_strided_slice %11 {offsets = [0, 0], sizes = [8, 32], strides = [1, 1]} : vector<64x32xf32> to vector<8x32xf32>
    %cst_19 = arith.constant dense<0.000000e+00> : vector<8x32xf32>
    %15 = tpu.matmul %12, %4, %cst_19 {dimension_numbers = #tpu.dot_dimension_numbers<[1], [0], [0], [1], [0, 0, 1, 1], [], []>} : vector<8x32xf32>, vector<32x32xf32>, vector<8x32xf32> -> vector<8x32xf32>
    %16 = arith.addf %14, %15 : vector<8x32xf32>
    %17 = math.tanh %16 : vector<8x32xf32>
    %18 = vector.extract_strided_slice %11 {offsets = [8, 0], sizes = [8, 32], strides = [1, 1]} : vector<64x32xf32> to vector<8x32xf32>
    %cst_20 = arith.constant dense<0.000000e+00> : vector<8x32xf32>
    %19 = tpu.matmul %17, %4, %cst_20 {dimension_numbers = #tpu.dot_dimension_numbers<[1], [0], [0], [1], [0, 0, 1, 1], [], []>} : vector<8x32xf32>, vector<32x32xf32>, vector<8x32xf32> -> vector<8x32xf32>
    %20 = arith.addf %18, %19 : vector<8x32xf32>
    %21 = math.tanh %20 : vector<8x32xf32>
    %cst_21 = arith.constant dense<0.000000e+00> : vector<8x32xf32>
    %22 = tpu.matmul %17, %3, %cst_21 {dimension_numbers = #tpu.dot_dimension_numbers<[1], [0], [0], [1], [0, 0, 1, 1], [], []>} : vector<8x32xf32>, vector<32x32xf32>, vector<8x32xf32> -> vector<8x32xf32>
    %23 = vector.broadcast %7 : vector<1x32xf32> to vector<8x32xf32>
    %24 = arith.addf %22, %23 : vector<8x32xf32>
    %cst_22 = arith.constant dense<0.000000e+00> : vector<8x32xf32>
    %25 = tpu.matmul %13, %5, %cst_22 {dimension_numbers = #tpu.dot_dimension_numbers<[1], [0], [0], [1], [0, 0, 1, 1], [], []>} : vector<8x32xf32>, vector<32x32xf32>, vector<8x32xf32> -> vector<8x32xf32>
    %26 = arith.addf %24, %25 : vector<8x32xf32>
    %27 = math.tanh %26 : vector<8x32xf32>
    %28 = vector.extract_strided_slice %11 {offsets = [16, 0], sizes = [8, 32], strides = [1, 1]} : vector<64x32xf32> to vector<8x32xf32>
    %cst_23 = arith.constant dense<0.000000e+00> : vector<8x32xf32>
    %29 = tpu.matmul %21, %4, %cst_23 {dimension_numbers = #tpu.dot_dimension_numbers<[1], [0], [0], [1], [0, 0, 1, 1], [], []>} : vector<8x32xf32>, vector<32x32xf32>, vector<8x32xf32> -> vector<8x32xf32>
    %30 = arith.addf %28, %29 : vector<8x32xf32>
    %31 = math.tanh %30 : vector<8x32xf32>
    %cst_24 = arith.constant dense<0.000000e+00> : vector<8x32xf32>
    %32 = tpu.matmul %21, %3, %cst_24 {dimension_numbers = #tpu.dot_dimension_numbers<[1], [0], [0], [1], [0, 0, 1, 1], [], []>} : vector<8x32xf32>, vector<32x32xf32>, vector<8x32xf32> -> vector<8x32xf32>
    %33 = vector.broadcast %7 : vector<1x32xf32> to vector<8x32xf32>
    %34 = arith.addf %32, %33 : vector<8x32xf32>
    %cst_25 = arith.constant dense<0.000000e+00> : vector<8x32xf32>
    %35 = tpu.matmul %27, %5, %cst_25 {dimension_numbers = #tpu.dot_dimension_numbers<[1], [0], [0], [1], [0, 0, 1, 1], [], []>} : vector<8x32xf32>, vector<32x32xf32>, vector<8x32xf32> -> vector<8x32xf32>
    %36 = arith.addf %34, %35 : vector<8x32xf32>
    %37 = math.tanh %36 : vector<8x32xf32>
    %38 = vector.extract_strided_slice %11 {offsets = [24, 0], sizes = [8, 32], strides = [1, 1]} : vector<64x32xf32> to vector<8x32xf32>
    %cst_26 = arith.constant dense<0.000000e+00> : vector<8x32xf32>
    %39 = tpu.matmul %31, %4, %cst_26 {dimension_numbers = #tpu.dot_dimension_numbers<[1], [0], [0], [1], [0, 0, 1, 1], [], []>} : vector<8x32xf32>, vector<32x32xf32>, vector<8x32xf32> -> vector<8x32xf32>
    %40 = arith.addf %38, %39 : vector<8x32xf32>
    %41 = math.tanh %40 : vector<8x32xf32>
    %cst_27 = arith.constant dense<0.000000e+00> : vector<8x32xf32>
    %42 = tpu.matmul %31, %3, %cst_27 {dimension_numbers = #tpu.dot_dimension_numbers<[1], [0], [0], [1], [0, 0, 1, 1], [], []>} : vector<8x32xf32>, vector<32x32xf32>, vector<8x32xf32> -> vector<8x32xf32>
    %43 = vector.broadcast %7 : vector<1x32xf32> to vector<8x32xf32>
    %44 = arith.addf %42, %43 : vector<8x32xf32>
    %cst_28 = arith.constant dense<0.000000e+00> : vector<8x32xf32>
    %45 = tpu.matmul %37, %5, %cst_28 {dimension_numbers = #tpu.dot_dimension_numbers<[1], [0], [0], [1], [0, 0, 1, 1], [], []>} : vector<8x32xf32>, vector<32x32xf32>, vector<8x32xf32> -> vector<8x32xf32>
    %46 = arith.addf %44, %45 : vector<8x32xf32>
    %47 = math.tanh %46 : vector<8x32xf32>
    %48 = vector.extract_strided_slice %11 {offsets = [32, 0], sizes = [8, 32], strides = [1, 1]} : vector<64x32xf32> to vector<8x32xf32>
    %cst_29 = arith.constant dense<0.000000e+00> : vector<8x32xf32>
    %49 = tpu.matmul %41, %4, %cst_29 {dimension_numbers = #tpu.dot_dimension_numbers<[1], [0], [0], [1], [0, 0, 1, 1], [], []>} : vector<8x32xf32>, vector<32x32xf32>, vector<8x32xf32> -> vector<8x32xf32>
    %50 = arith.addf %48, %49 : vector<8x32xf32>
    %51 = math.tanh %50 : vector<8x32xf32>
    %cst_30 = arith.constant dense<0.000000e+00> : vector<8x32xf32>
    %52 = tpu.matmul %41, %3, %cst_30 {dimension_numbers = #tpu.dot_dimension_numbers<[1], [0], [0], [1], [0, 0, 1, 1], [], []>} : vector<8x32xf32>, vector<32x32xf32>, vector<8x32xf32> -> vector<8x32xf32>
    %53 = vector.broadcast %7 : vector<1x32xf32> to vector<8x32xf32>
    %54 = arith.addf %52, %53 : vector<8x32xf32>
    %cst_31 = arith.constant dense<0.000000e+00> : vector<8x32xf32>
    %55 = tpu.matmul %47, %5, %cst_31 {dimension_numbers = #tpu.dot_dimension_numbers<[1], [0], [0], [1], [0, 0, 1, 1], [], []>} : vector<8x32xf32>, vector<32x32xf32>, vector<8x32xf32> -> vector<8x32xf32>
    %56 = arith.addf %54, %55 : vector<8x32xf32>
    %57 = math.tanh %56 : vector<8x32xf32>
    %58 = vector.extract_strided_slice %11 {offsets = [40, 0], sizes = [8, 32], strides = [1, 1]} : vector<64x32xf32> to vector<8x32xf32>
    %cst_32 = arith.constant dense<0.000000e+00> : vector<8x32xf32>
    %59 = tpu.matmul %51, %4, %cst_32 {dimension_numbers = #tpu.dot_dimension_numbers<[1], [0], [0], [1], [0, 0, 1, 1], [], []>} : vector<8x32xf32>, vector<32x32xf32>, vector<8x32xf32> -> vector<8x32xf32>
    %60 = arith.addf %58, %59 : vector<8x32xf32>
    %61 = math.tanh %60 : vector<8x32xf32>
    %cst_33 = arith.constant dense<0.000000e+00> : vector<8x32xf32>
    %62 = tpu.matmul %51, %3, %cst_33 {dimension_numbers = #tpu.dot_dimension_numbers<[1], [0], [0], [1], [0, 0, 1, 1], [], []>} : vector<8x32xf32>, vector<32x32xf32>, vector<8x32xf32> -> vector<8x32xf32>
    %63 = vector.broadcast %7 : vector<1x32xf32> to vector<8x32xf32>
    %64 = arith.addf %62, %63 : vector<8x32xf32>
    %cst_34 = arith.constant dense<0.000000e+00> : vector<8x32xf32>
    %65 = tpu.matmul %57, %5, %cst_34 {dimension_numbers = #tpu.dot_dimension_numbers<[1], [0], [0], [1], [0, 0, 1, 1], [], []>} : vector<8x32xf32>, vector<32x32xf32>, vector<8x32xf32> -> vector<8x32xf32>
    %66 = arith.addf %64, %65 : vector<8x32xf32>
    %67 = math.tanh %66 : vector<8x32xf32>
    %68 = vector.extract_strided_slice %11 {offsets = [48, 0], sizes = [8, 32], strides = [1, 1]} : vector<64x32xf32> to vector<8x32xf32>
    %cst_35 = arith.constant dense<0.000000e+00> : vector<8x32xf32>
    %69 = tpu.matmul %61, %4, %cst_35 {dimension_numbers = #tpu.dot_dimension_numbers<[1], [0], [0], [1], [0, 0, 1, 1], [], []>} : vector<8x32xf32>, vector<32x32xf32>, vector<8x32xf32> -> vector<8x32xf32>
    %70 = arith.addf %68, %69 : vector<8x32xf32>
    %71 = math.tanh %70 : vector<8x32xf32>
    %cst_36 = arith.constant dense<0.000000e+00> : vector<8x32xf32>
    %72 = tpu.matmul %61, %3, %cst_36 {dimension_numbers = #tpu.dot_dimension_numbers<[1], [0], [0], [1], [0, 0, 1, 1], [], []>} : vector<8x32xf32>, vector<32x32xf32>, vector<8x32xf32> -> vector<8x32xf32>
    %73 = vector.broadcast %7 : vector<1x32xf32> to vector<8x32xf32>
    %74 = arith.addf %72, %73 : vector<8x32xf32>
    %cst_37 = arith.constant dense<0.000000e+00> : vector<8x32xf32>
    %75 = tpu.matmul %67, %5, %cst_37 {dimension_numbers = #tpu.dot_dimension_numbers<[1], [0], [0], [1], [0, 0, 1, 1], [], []>} : vector<8x32xf32>, vector<32x32xf32>, vector<8x32xf32> -> vector<8x32xf32>
    %76 = arith.addf %74, %75 : vector<8x32xf32>
    %77 = math.tanh %76 : vector<8x32xf32>
    %78 = vector.extract_strided_slice %11 {offsets = [56, 0], sizes = [8, 32], strides = [1, 1]} : vector<64x32xf32> to vector<8x32xf32>
    %cst_38 = arith.constant dense<0.000000e+00> : vector<8x32xf32>
    %79 = tpu.matmul %71, %4, %cst_38 {dimension_numbers = #tpu.dot_dimension_numbers<[1], [0], [0], [1], [0, 0, 1, 1], [], []>} : vector<8x32xf32>, vector<32x32xf32>, vector<8x32xf32> -> vector<8x32xf32>
    %80 = arith.addf %78, %79 : vector<8x32xf32>
    %81 = math.tanh %80 : vector<8x32xf32>
    %cst_39 = arith.constant dense<0.000000e+00> : vector<8x32xf32>
    %82 = tpu.matmul %71, %3, %cst_39 {dimension_numbers = #tpu.dot_dimension_numbers<[1], [0], [0], [1], [0, 0, 1, 1], [], []>} : vector<8x32xf32>, vector<32x32xf32>, vector<8x32xf32> -> vector<8x32xf32>
    %83 = vector.broadcast %7 : vector<1x32xf32> to vector<8x32xf32>
    %84 = arith.addf %82, %83 : vector<8x32xf32>
    %cst_40 = arith.constant dense<0.000000e+00> : vector<8x32xf32>
    %85 = tpu.matmul %77, %5, %cst_40 {dimension_numbers = #tpu.dot_dimension_numbers<[1], [0], [0], [1], [0, 0, 1, 1], [], []>} : vector<8x32xf32>, vector<32x32xf32>, vector<8x32xf32> -> vector<8x32xf32>
    %86 = arith.addf %84, %85 : vector<8x32xf32>
    %87 = math.tanh %86 : vector<8x32xf32>
    %cst_41 = arith.constant dense<0.000000e+00> : vector<8x32xf32>
    %88 = tpu.matmul %81, %3, %cst_41 {dimension_numbers = #tpu.dot_dimension_numbers<[1], [0], [0], [1], [0, 0, 1, 1], [], []>} : vector<8x32xf32>, vector<32x32xf32>, vector<8x32xf32> -> vector<8x32xf32>
    %89 = vector.broadcast %7 : vector<1x32xf32> to vector<8x32xf32>
    %90 = arith.addf %88, %89 : vector<8x32xf32>
    %cst_42 = arith.constant dense<0.000000e+00> : vector<8x32xf32>
    %91 = tpu.matmul %87, %5, %cst_42 {dimension_numbers = #tpu.dot_dimension_numbers<[1], [0], [0], [1], [0, 0, 1, 1], [], []>} : vector<8x32xf32>, vector<32x32xf32>, vector<8x32xf32> -> vector<8x32xf32>
    %92 = arith.addf %90, %91 : vector<8x32xf32>
    %93 = math.tanh %92 : vector<8x32xf32>
    %cst_43 = arith.constant dense<0.000000e+00> : vector<8x128xf32>
    %94 = tpu.matmul %93, %0, %cst_43 {dimension_numbers = #tpu.dot_dimension_numbers<[1], [0], [0], [1], [0, 0, 1, 1], [], []>} : vector<8x32xf32>, vector<32x128xf32>, vector<8x128xf32> -> vector<8x128xf32>
    %95 = vector.broadcast %1 : vector<1x128xf32> to vector<8x128xf32>
    %96 = arith.addf %94, %95 : vector<8x128xf32>
    %c0_44 = arith.constant 0 : index
    %c0_45 = arith.constant 0 : index
    %97 = vector.load %arg9[%c0_44, %c0_45] : memref<8x128xf32, #tpu.memory_space<vmem>>, vector<8x128xf32>
    tpu.vector_store %arg9[%c0_44, %c0_45], %96 {strides = array<i32>} : memref<8x128xf32, #tpu.memory_space<vmem>>, vector<8x128xf32>,
    return
  }
}

</mosaic_0001>

<llo_original>
// kernel: _rnn_forward_impl.1
$region0: #{_rnn_forward_impl.1}
  #allocation0 [shape = 'u32[]', space=smem, size = 0x4, offset = 0x4, fixed_abs, tag = 'smem constant byte address 0x4 - core index']
  #allocation1 [shape = 'u32[144,128]{1,0:T(1,128)}', space=vmem, size = 0x12000, scoped, tag = 'internal scratch']
  %s0 = inlined_call_operand.vmem [shape: f32[64,16], index: 0, kind: input, shape index: {}]
  %s1 = inlined_call_operand.vmem [shape: f32[16,32], index: 1, kind: input, shape index: {}]
  %s2 = inlined_call_operand.vmem [shape: f32[32,32], index: 2, kind: input, shape index: {}]
  %s3 = inlined_call_operand.vmem [shape: f32[1,32], index: 3, kind: input, shape index: {}]
  %s4 = inlined_call_operand.vmem [shape: f32[32,32], index: 4, kind: input, shape index: {}]
  %s5 = inlined_call_operand.vmem [shape: f32[32,32], index: 5, kind: input, shape index: {}]
  %s6 = inlined_call_operand.vmem [shape: f32[1,32], index: 6, kind: input, shape index: {}]
  %s7 = inlined_call_operand.hbm [shape: f32[32,128], index: 7, kind: input, shape index: {}]
  %s8 = inlined_call_operand.vmem [shape: f32[1,128], index: 8, kind: input, shape index: {}]
  %s9 = inlined_call_operand.vmem [shape: f32[8,128], index: 9, kind: output, shape index: {}]
  %s10 = sld [smem:[#allocation0]]
  $region50: #{_rnn_forward_impl.1} parent=0
    _
  %s12 = ssub.s32 1, %s10
  %s13 = scalar_select 0, %s12, %s10
  $region1: #{_rnn_forward_impl.1} parent=0
    #allocation2 [shape = 'u8[16384]{0}', space=vmem, size = 0x4000, scoped, tag = 'input window, operand 7, single buffered']
    #allocation3 [shape = 's32[1]{0}', space=sflag, size = 0x4, scoped, tag = 'scoped memory for _rnn_forward_impl.1']
    %14 = vsyncpa [#allocation3], 0
    // Predicated region
    $region2: #{_rnn_forward_impl.1} parent=1 // pred_check
      _
    $region3: #{_rnn_forward_impl.1} parent=1 // pred_check_branch
      %16 = sbr.rel (0) target = $region5
    $region4: #{_rnn_forward_impl.1} parent=1 // pred_region
      _
    $region5: #{_rnn_forward_impl.1} parent=1 // pred_fallthru
      _
    // Predicated region
    $region6: #{_rnn_forward_impl.1} parent=1 // pred_check
      _
    $region7: #{_rnn_forward_impl.1} parent=1 // pred_check_branch
      %18 = sbr.rel (0) target = $region9
    $region8: #{_rnn_forward_impl.1} parent=1 // pred_region
      _
    $region9: #{_rnn_forward_impl.1} parent=1 // pred_fallthru
      _
    // Predicated region
    $region10: #{_rnn_forward_impl.1} parent=1 // pred_check
      _
    $region11: #{_rnn_forward_impl.1} parent=1 // pred_check_branch
      %20 = sbr.rel (0) target = $region13
    $region12: #{_rnn_forward_impl.1} parent=1 // pred_region
      _
    $region13: #{_rnn_forward_impl.1} parent=1 // pred_fallthru
      _
    // Predicated region
    $region14: #{_rnn_forward_impl.1} parent=1 // pred_check
      _
    $region15: #{_rnn_forward_impl.1} parent=1 // pred_check_branch
      %22 = sbr.rel (0) target = $region17
    $region16: #{_rnn_forward_impl.1} parent=1 // pred_region
      _
    $region17: #{_rnn_forward_impl.1} parent=1 // pred_fallthru
      _
    // Predicated region
    $region18: #{_rnn_forward_impl.1} parent=1 // pred_check
      _
    $region19: #{_rnn_forward_impl.1} parent=1 // pred_check_branch
      %24 = sbr.rel (0) target = $region21
    $region20: #{_rnn_forward_impl.1} parent=1 // pred_region
      _
    $region21: #{_rnn_forward_impl.1} parent=1 // pred_fallthru
      _
    // Predicated region
    $region22: #{_rnn_forward_impl.1} parent=1 // pred_check
      _
    $region23: #{_rnn_forward_impl.1} parent=1 // pred_check_branch
      %26 = sbr.rel (0) target = $region25
    $region24: #{_rnn_forward_impl.1} parent=1 // pred_region
      _
    $region25: #{_rnn_forward_impl.1} parent=1 // pred_fallthru
      _
    // Predicated region
    $region26: #{_rnn_forward_impl.1} parent=1 // pred_check
      _
    $region27: #{_rnn_forward_impl.1} parent=1 // pred_check_branch
      %28 = sbr.rel (0) target = $region29
    $region28: #{_rnn_forward_impl.1} parent=1 // pred_region
      _
    $region29: #{_rnn_forward_impl.1} parent=1 // pred_fallthru
      _
    // Predicated region
    $region30: #{_rnn_forward_impl.1} parent=1 // pred_check
      _
    $region31: #{_rnn_forward_impl.1} parent=1 // pred_check_branch
      %30 = sbr.rel (0) target = $region33
    $region32: #{_rnn_forward_impl.1} parent=1 // pred_region
      %s32 = ssub.s32 512, 512
      %33 = vsyncadd [#allocation3], %s32
      %s34 = sshll.u32 [#allocation2], 4
      %s35 = int_to_ptr.vmem [resolvable:$true] %s34
      %40 = dma.hbm_to_vmem [thread:$0]  %s7, 512, %s35, [#allocation3], 128, 128, 8
    $region33: #{_rnn_forward_impl.1} parent=1 // pred_fallthru
      _
    // Predicated region
    $region34: #{_rnn_forward_impl.1} parent=1 // pred_check
      _
    $region35: #{_rnn_forward_impl.1} parent=1 // pred_check_branch
      %42 = sbr.rel (0) target = $region37
    $region36: #{_rnn_forward_impl.1} parent=1 // pred_region
      _
    $region37: #{_rnn_forward_impl.1} parent=1 // pred_fallthru
      _
    // Predicated region
    $region38: #{_rnn_forward_impl.1} parent=1 // pred_check
      _
    $region39: #{_rnn_forward_impl.1} parent=1 // pred_check_branch
      %44 = sbr.rel (0) target = $region41
    $region40: #{_rnn_forward_impl.1} parent=1 // pred_region
      %45 = dma.done [#allocation3], 512
    $region41: #{_rnn_forward_impl.1} parent=1 // pred_fallthru
      _
    %v46 = vld [vmem:[#allocation2] sm:$0xff]
    %v47 = vld [vmem:[#allocation2 + $0x8] sm:$0xff]
    %v48 = vld [vmem:[#allocation2 + $0x10] sm:$0xff]
    %v49 = vld [vmem:[#allocation2 + $0x18] sm:$0xff]
    %v50 = vld [vmem:[%s8] sm:$0x1]
    %v51 = vld [vmem:[%s1] sm:$0xff]
    %v52 = vld [vmem:[%s1 + $0x8] sm:$0xff]
    %v53 = vld [vmem:[%s4] sm:$0xff]
    %v54 = vld [vmem:[%s4 + $0x8] sm:$0xff]
    %v55 = vld [vmem:[%s4 + $0x10] sm:$0xff]
    %v56 = vld [vmem:[%s4 + $0x18] sm:$0xff]
    %v57 = vld [vmem:[%s2] sm:$0xff]
    %v58 = vld [vmem:[%s2 + $0x8] sm:$0xff]
    %v59 = vld [vmem:[%s2 + $0x10] sm:$0xff]
    %v60 = vld [vmem:[%s2 + $0x18] sm:$0xff]
    %v61 = vld [vmem:[%s5] sm:$0xff]
    %v62 = vld [vmem:[%s5 + $0x8] sm:$0xff]
    %v63 = vld [vmem:[%s5 + $0x10] sm:$0xff]
    %v64 = vld [vmem:[%s5 + $0x18] sm:$0xff]
    %v65 = vld [vmem:[%s3] sm:$0x1]
    %v66 = vld [vmem:[%s6] sm:$0x1]
    %v67 = vld [vmem:[%s0] sm:$0xff]
    %v68 = vld [vmem:[%s0 + $0x8] sm:$0xff]
    %v69 = vld [vmem:[%s0 + $0x10] sm:$0xff]
    %v70 = vld [vmem:[%s0 + $0x18] sm:$0xff]
    %v71 = vld [vmem:[%s0 + $0x20] sm:$0xff]
    %v72 = vld [vmem:[%s0 + $0x28] sm:$0xff]
    %v73 = vld [vmem:[%s0 + $0x30] sm:$0xff]
    %v74 = vld [vmem:[%s0 + $0x38] sm:$0xff]
    %v76 = vlaneseq
    %v77 = vshrl.u32 %v76, 7
    %v78 = vsub.s32 0, %v77
    %v79 = vrot.slane %v65, %v78
    %vm81 = vcmask 130048
    %v83 = vsel %vm81, %v67, 0
    %v86 = vsel %vm81, %v68, 0
    %v89 = vsel %vm81, %v69, 0
    %v92 = vsel %vm81, %v70, 0
    %v95 = vsel %vm81, %v71, 0
    %v98 = vsel %vm81, %v72, 0
    %v101 = vsel %vm81, %v73, 0
    %v104 = vsel %vm81, %v74, 0
    %106 = vmatprep.subr.mxu0 0.0
    %107 = vmatpush1.msra.mxu0 %v51
    %108 = vmatprep.subr.mxu0 0.0
    %109 = vmatpush1.msra.mxu0 %v52
    %110 = vmatprep.subr.mxu0 0.0
    %111 = vmatpush1.msra.mxu0 0.0
    %112 = vmatprep.subr.mxu0 0.0
    %113 = vmatpush1.msra.mxu0 0.0
    %114 = vmatprep.subr.mxu0 0.0
    %115 = vmatpush1.msra.mxu0 0.0
    %116 = vmatprep.subr.mxu0 0.0
    %117 = vmatpush1.msra.mxu0 0.0
    %118 = vmatprep.subr.mxu0 0.0
    %119 = vmatpush1.msra.mxu0 0.0
    %120 = vmatprep.subr.mxu0 0.0
    %121 = vmatpush1.msra.mxu0 0.0
    %122 = vmatprep.subr.mxu0 0.0
    %123 = vmatpush1.msra.mxu0 0.0
    %124 = vmatprep.subr.mxu0 0.0
    %125 = vmatpush1.msra.mxu0 0.0
    %126 = vmatprep.subr.mxu0 0.0
    %127 = vmatpush1.msra.mxu0 0.0
    %128 = vmatprep.subr.mxu0 0.0
    %129 = vmatpush1.msra.mxu0 0.0
    %130 = vmatprep.subr.mxu0 0.0
    %131 = vmatpush1.msra.mxu0 0.0
    %132 = vmatprep.subr.mxu0 0.0
    %133 = vmatpush1.msra.mxu0 0.0
    %134 = vmatprep.subr.mxu0 0.0
    %135 = vmatpush1.msra.mxu0 0.0
    %136 = vmatprep.subr.mxu0 0.0
    %137 = vmatpush1.msra.mxu0 0.0
    %138 = vmatprep.subr.mxu0 0.0
    %139 = vmatpush1.msra.mxu0 0.0
    %140 = vmatprep.subr.mxu0 0.0
    %141 = vmatpush1.msra.mxu0 0.0
    %142 = vmatprep.subr.mxu0 0.0
    %143 = vmatpush1.msra.mxu0 0.0
    %144 = vmatprep.subr.mxu0 0.0
    %145 = vmatpush1.msra.mxu0 0.0
    %146 = vmatprep.subr.mxu0 0.0
    %147 = vmatpush1.msra.mxu0 0.0
    %148 = vmatprep.subr.mxu0 0.0
    %149 = vmatpush1.msra.mxu0 0.0
    %150 = vmatprep.subr.mxu0 0.0
    %151 = vmatpush1.msra.mxu0 0.0
    %152 = vmatprep.subr.mxu0 0.0
    %153 = vmatpush1.msra.mxu0 0.0
    %154 = vmatprep.subr.mxu0 0.0
    %155 = vmatpush1.msra.mxu0 0.0
    %156 = vmatprep.subr.mxu0 0.0
    %157 = vmatpush1.msra.mxu0 0.0
    %158 = vmatprep.subr.mxu0 0.0
    %159 = vmatpush1.msra.mxu0 0.0
    %160 = vmatprep.subr.mxu0 0.0
    %161 = vmatpush1.msra.mxu0 0.0
    %162 = vmatprep.subr.mxu0 0.0
    %163 = vmatpush1.msra.mxu0 0.0
    %164 = vmatprep.subr.mxu0 0.0
    %165 = vmatpush1.msra.mxu0 0.0
    %166 = vmatprep.subr.mxu0 0.0
    %167 = vmatpush1.msra.mxu0 0.0
    %168 = vmatprep.subr.mxu0 0.0
    %169 = vmatpush1.msra.mxu0 0.0
    %170 = vmatprep.mubr.f32.mxu0 0.0
    %171 = vmatmul.mubr.f32.gmra.mrb[0].mxu0 %v83
    %v172 = vpop.f32.mrb[0].mxu0
    %v173 = vadd.f32 %v79, %v172
    %v174 = vpop.f32.mrb[0].mxu0
    %175 = vmatprep.mubr.f32.mxu0 0.0
    %176 = vmatmul.mubr.f32.gmra.mrb[0].mxu0 %v86
    %v177 = vpop.f32.mrb[0].mxu0
    %v178 = vadd.f32 %v79, %v177
    %v179 = vpop.f32.mrb[0].mxu0
    %180 = vmatprep.mubr.f32.mxu0 0.0
    %181 = vmatmul.mubr.f32.gmra.mrb[0].mxu0 %v89
    %v182 = vpop.f32.mrb[0].mxu0
    %v183 = vadd.f32 %v79, %v182
    %v184 = vpop.f32.mrb[0].mxu0
    %185 = vmatprep.mubr.f32.mxu0 0.0
    %186 = vmatmul.mubr.f32.gmra.mrb[0].mxu0 %v92
    %v187 = vpop.f32.mrb[0].mxu0
    %v188 = vadd.f32 %v79, %v187
    %v189 = vpop.f32.mrb[0].mxu0
    %190 = vmatprep.mubr.f32.mxu0 0.0
    %191 = vmatmul.mubr.f32.gmra.mrb[0].mxu0 %v95
    %v192 = vpop.f32.mrb[0].mxu0
    %v193 = vadd.f32 %v79, %v192
    %v194 = vpop.f32.mrb[0].mxu0
    %195 = vmatprep.mubr.f32.mxu0 0.0
    %196 = vmatmul.mubr.f32.gmra.mrb[0].mxu0 %v98
    %v197 = vpop.f32.mrb[0].mxu0
    %v198 = vadd.f32 %v79, %v197
    %v199 = vpop.f32.mrb[0].mxu0
    %200 = vmatprep.mubr.f32.mxu0 0.0
    %201 = vmatmul.mubr.f32.gmra.mrb[0].mxu0 %v101
    %v202 = vpop.f32.mrb[0].mxu0
    %v203 = vadd.f32 %v79, %v202
    %v204 = vpop.f32.mrb[0].mxu0
    %205 = vmatprep.mubr.f32.mxu0 0.0
    %206 = vmatmul.mubr.f32.gmra.mrb[0].mxu0 %v104
    %v207 = vpop.f32.mrb[0].mxu0
    %v208 = vadd.f32 %v79, %v207
    %v209 = vpop.f32.mrb[0].mxu0
    %210 = vdwg.mxu0
    %vm211 = vcmask 261120
    %v213 = vsel %vm211, 0.0, 0
    %215 = vmatprep.subr.mxu0 0.0
    %216 = vmatpush1.msra.mxu0 %v57
    %217 = vmatprep.subr.mxu0 0.0
    %218 = vmatpush1.msra.mxu0 %v58
    %219 = vmatprep.subr.mxu0 0.0
    %220 = vmatpush1.msra.mxu0 %v59
    %221 = vmatprep.subr.mxu0 0.0
    %222 = vmatpush1.msra.mxu0 %v60
    %223 = vmatprep.subr.mxu0 0.0
    %224 = vmatpush1.msra.mxu0 0.0
    %225 = vmatprep.subr.mxu0 0.0
    %226 = vmatpush1.msra.mxu0 0.0
    %227 = vmatprep.subr.mxu0 0.0
    %228 = vmatpush1.msra.mxu0 0.0
    %229 = vmatprep.subr.mxu0 0.0
    %230 = vmatpush1.msra.mxu0 0.0
    %231 = vmatprep.subr.mxu0 0.0
    %232 = vmatpush1.msra.mxu0 0.0
    %233 = vmatprep.subr.mxu0 0.0
    %234 = vmatpush1.msra.mxu0 0.0
    %235 = vmatprep.subr.mxu0 0.0
    %236 = vmatpush1.msra.mxu0 0.0
    %237 = vmatprep.subr.mxu0 0.0
    %238 = vmatpush1.msra.mxu0 0.0
    %239 = vmatprep.subr.mxu0 0.0
    %240 = vmatpush1.msra.mxu0 0.0
    %241 = vmatprep.subr.mxu0 0.0
    %242 = vmatpush1.msra.mxu0 0.0
    %243 = vmatprep.subr.mxu0 0.0
    %244 = vmatpush1.msra.mxu0 0.0
    %245 = vmatprep.subr.mxu0 0.0
    %246 = vmatpush1.msra.mxu0 0.0
    %247 = vmatprep.subr.mxu0 0.0
    %248 = vmatpush1.msra.mxu0 0.0
    %249 = vmatprep.subr.mxu0 0.0
    %250 = vmatpush1.msra.mxu0 0.0
    %251 = vmatprep.subr.mxu0 0.0
    %252 = vmatpush1.msra.mxu0 0.0
    %253 = vmatprep.subr.mxu0 0.0
    %254 = vmatpush1.msra.mxu0 0.0
    %255 = vmatprep.subr.mxu0 0.0
    %256 = vmatpush1.msra.mxu0 0.0
    %257 = vmatprep.subr.mxu0 0.0
    %258 = vmatpush1.msra.mxu0 0.0
    %259 = vmatprep.subr.mxu0 0.0
    %260 = vmatpush1.msra.mxu0 0.0
    %261 = vmatprep.subr.mxu0 0.0
    %262 = vmatpush1.msra.mxu0 0.0
    %263 = vmatprep.subr.mxu0 0.0
    %264 = vmatpush1.msra.mxu0 0.0
    %265 = vmatprep.subr.mxu0 0.0
    %266 = vmatpush1.msra.mxu0 0.0
    %267 = vmatprep.subr.mxu0 0.0
    %268 = vmatpush1.msra.mxu0 0.0
    %269 = vmatprep.subr.mxu0 0.0
    %270 = vmatpush1.msra.mxu0 0.0
    %271 = vmatprep.subr.mxu0 0.0
    %272 = vmatpush1.msra.mxu0 0.0
    %273 = vmatprep.subr.mxu0 0.0
    %274 = vmatpush1.msra.mxu0 0.0
    %275 = vmatprep.subr.mxu0 0.0
    %276 = vmatpush1.msra.mxu0 0.0
    %277 = vmatprep.subr.mxu0 0.0
    %278 = vmatpush1.msra.mxu0 0.0
    %279 = vmatprep.mubr.f32.mxu0 0.0
    %280 = vmatmul.mubr.f32.gmra.mrb[0].mxu0 %v213
    %v281 = vpop.f32.mrb[0].mxu0
    %v282 = vadd.f32 0.0, %v281
    %v283 = vpop.f32.mrb[0].mxu0
    %284 = vdwg.mxu0
    %v285 = vadd.f32 %v173, %v282
    %v286 = vtanh.pop %v285
    %v288 = vsel %vm211, %v286, 0
    %290 = vmatprep.subr.mxu0 0.0
    %291 = vmatpush1.msra.mxu0 %v57
    %292 = vmatprep.subr.mxu0 0.0
    %293 = vmatpush1.msra.mxu0 %v58
    %294 = vmatprep.subr.mxu0 0.0
    %295 = vmatpush1.msra.mxu0 %v59
    %296 = vmatprep.subr.mxu0 0.0
    %297 = vmatpush1.msra.mxu0 %v60
    %298 = vmatprep.subr.mxu0 0.0
    %299 = vmatpush1.msra.mxu0 0.0
    %300 = vmatprep.subr.mxu0 0.0
    %301 = vmatpush1.msra.mxu0 0.0
    %302 = vmatprep.subr.mxu0 0.0
    %303 = vmatpush1.msra.mxu0 0.0
    %304 = vmatprep.subr.mxu0 0.0
    %305 = vmatpush1.msra.mxu0 0.0
    %306 = vmatprep.subr.mxu0 0.0
    %307 = vmatpush1.msra.mxu0 0.0
    %308 = vmatprep.subr.mxu0 0.0
    %309 = vmatpush1.msra.mxu0 0.0
    %310 = vmatprep.subr.mxu0 0.0
    %311 = vmatpush1.msra.mxu0 0.0
    %312 = vmatprep.subr.mxu0 0.0
    %313 = vmatpush1.msra.mxu0 0.0
    %314 = vmatprep.subr.mxu0 0.0
    %315 = vmatpush1.msra.mxu0 0.0
    %316 = vmatprep.subr.mxu0 0.0
    %317 = vmatpush1.msra.mxu0 0.0
    %318 = vmatprep.subr.mxu0 0.0
    %319 = vmatpush1.msra.mxu0 0.0
    %320 = vmatprep.subr.mxu0 0.0
    %321 = vmatpush1.msra.mxu0 0.0
    %322 = vmatprep.subr.mxu0 0.0
    %323 = vmatpush1.msra.mxu0 0.0
    %324 = vmatprep.subr.mxu0 0.0
    %325 = vmatpush1.msra.mxu0 0.0
    %326 = vmatprep.subr.mxu0 0.0
    %327 = vmatpush1.msra.mxu0 0.0
    %328 = vmatprep.subr.mxu0 0.0
    %329 = vmatpush1.msra.mxu0 0.0
    %330 = vmatprep.subr.mxu0 0.0
    %331 = vmatpush1.msra.mxu0 0.0
    %332 = vmatprep.subr.mxu0 0.0
    %333 = vmatpush1.msra.mxu0 0.0
    %334 = vmatprep.subr.mxu0 0.0
    %335 = vmatpush1.msra.mxu0 0.0
    %336 = vmatprep.subr.mxu0 0.0
    %337 = vmatpush1.msra.mxu0 0.0
    %338 = vmatprep.subr.mxu0 0.0
    %339 = vmatpush1.msra.mxu0 0.0
    %340 = vmatprep.subr.mxu0 0.0
    %341 = vmatpush1.msra.mxu0 0.0
    %342 = vmatprep.subr.mxu0 0.0
    %343 = vmatpush1.msra.mxu0 0.0
    %344 = vmatprep.subr.mxu0 0.0
    %345 = vmatpush1.msra.mxu0 0.0
    %346 = vmatprep.subr.mxu0 0.0
    %347 = vmatpush1.msra.mxu0 0.0
    %348 = vmatprep.subr.mxu0 0.0
    %349 = vmatpush1.msra.mxu0 0.0
    %350 = vmatprep.subr.mxu0 0.0
    %351 = vmatpush1.msra.mxu0 0.0
    %352 = vmatprep.subr.mxu0 0.0
    %353 = vmatpush1.msra.mxu0 0.0
    %354 = vmatprep.mubr.f32.mxu0 0.0
    %355 = vmatmul.mubr.f32.gmra.mrb[0].mxu0 %v288
    %v356 = vpop.f32.mrb[0].mxu0
    %v357 = vadd.f32 0.0, %v356
    %v358 = vpop.f32.mrb[0].mxu0
    %359 = vdwg.mxu0
    %v360 = vadd.f32 %v178, %v357
    %v361 = vtanh.pop %v360
    %v363 = vlaneseq
    %v364 = vshrl.u32 %v363, 7
    %v365 = vsub.s32 0, %v364
    %v366 = vrot.slane %v66, %v365
    %368 = vmatprep.subr.mxu0 0.0
    %369 = vmatpush1.msra.mxu0 %v53
    %370 = vmatprep.subr.mxu0 0.0
    %371 = vmatpush1.msra.mxu0 %v54
    %372 = vmatprep.subr.mxu0 0.0
    %373 = vmatpush1.msra.mxu0 %v55
    %374 = vmatprep.subr.mxu0 0.0
    %375 = vmatpush1.msra.mxu0 %v56
    %376 = vmatprep.subr.mxu0 0.0
    %377 = vmatpush1.msra.mxu0 0.0
    %378 = vmatprep.subr.mxu0 0.0
    %379 = vmatpush1.msra.mxu0 0.0
    %380 = vmatprep.subr.mxu0 0.0
    %381 = vmatpush1.msra.mxu0 0.0
    %382 = vmatprep.subr.mxu0 0.0
    %383 = vmatpush1.msra.mxu0 0.0
    %384 = vmatprep.subr.mxu0 0.0
    %385 = vmatpush1.msra.mxu0 0.0
    %386 = vmatprep.subr.mxu0 0.0
    %387 = vmatpush1.msra.mxu0 0.0
    %388 = vmatprep.subr.mxu0 0.0
    %389 = vmatpush1.msra.mxu0 0.0
    %390 = vmatprep.subr.mxu0 0.0
    %391 = vmatpush1.msra.mxu0 0.0
    %392 = vmatprep.subr.mxu0 0.0
    %393 = vmatpush1.msra.mxu0 0.0
    %394 = vmatprep.subr.mxu0 0.0
    %395 = vmatpush1.msra.mxu0 0.0
    %396 = vmatprep.subr.mxu0 0.0
    %397 = vmatpush1.msra.mxu0 0.0
    %398 = vmatprep.subr.mxu0 0.0
    %399 = vmatpush1.msra.mxu0 0.0
    %400 = vmatprep.subr.mxu0 0.0
    %401 = vmatpush1.msra.mxu0 0.0
    %402 = vmatprep.subr.mxu0 0.0
    %403 = vmatpush1.msra.mxu0 0.0
    %404 = vmatprep.subr.mxu0 0.0
    %405 = vmatpush1.msra.mxu0 0.0
    %406 = vmatprep.subr.mxu0 0.0
    %407 = vmatpush1.msra.mxu0 0.0
    %408 = vmatprep.subr.mxu0 0.0
    %409 = vmatpush1.msra.mxu0 0.0
    %410 = vmatprep.subr.mxu0 0.0
    %411 = vmatpush1.msra.mxu0 0.0
    %412 = vmatprep.subr.mxu0 0.0
    %413 = vmatpush1.msra.mxu0 0.0
    %414 = vmatprep.subr.mxu0 0.0
    %415 = vmatpush1.msra.mxu0 0.0
    %416 = vmatprep.subr.mxu0 0.0
    %417 = vmatpush1.msra.mxu0 0.0
    %418 = vmatprep.subr.mxu0 0.0
    %419 = vmatpush1.msra.mxu0 0.0
    %420 = vmatprep.subr.mxu0 0.0
    %421 = vmatpush1.msra.mxu0 0.0
    %422 = vmatprep.subr.mxu0 0.0
    %423 = vmatpush1.msra.mxu0 0.0
    %424 = vmatprep.subr.mxu0 0.0
    %425 = vmatpush1.msra.mxu0 0.0
    %426 = vmatprep.subr.mxu0 0.0
    %427 = vmatpush1.msra.mxu0 0.0
    %428 = vmatprep.subr.mxu0 0.0
    %429 = vmatpush1.msra.mxu0 0.0
    %430 = vmatprep.subr.mxu0 0.0
    %431 = vmatpush1.msra.mxu0 0.0
    %432 = vmatprep.mubr.f32.mxu0 0.0
    %433 = vmatmul.mubr.f32.gmra.mrb[0].mxu0 %v288
    %v434 = vpop.f32.mrb[0].mxu0
    %v435 = vadd.f32 %v366, %v434
    %v436 = vpop.f32.mrb[0].mxu0
    %437 = vdwg.mxu0
    %438 = vmatprep.subr.mxu0 0.0
    %439 = vmatpush1.msra.mxu0 %v61
    %440 = vmatprep.subr.mxu0 0.0
    %441 = vmatpush1.msra.mxu0 %v62
    %442 = vmatprep.subr.mxu0 0.0
    %443 = vmatpush1.msra.mxu0 %v63
    %444 = vmatprep.subr.mxu0 0.0
    %445 = vmatpush1.msra.mxu0 %v64
    %446 = vmatprep.subr.mxu0 0.0
    %447 = vmatpush1.msra.mxu0 0.0
    %448 = vmatprep.subr.mxu0 0.0
    %449 = vmatpush1.msra.mxu0 0.0
    %450 = vmatprep.subr.mxu0 0.0
    %451 = vmatpush1.msra.mxu0 0.0
    %452 = vmatprep.subr.mxu0 0.0
    %453 = vmatpush1.msra.mxu0 0.0
    %454 = vmatprep.subr.mxu0 0.0
    %455 = vmatpush1.msra.mxu0 0.0
    %456 = vmatprep.subr.mxu0 0.0
    %457 = vmatpush1.msra.mxu0 0.0
    %458 = vmatprep.subr.mxu0 0.0
    %459 = vmatpush1.msra.mxu0 0.0
    %460 = vmatprep.subr.mxu0 0.0
    %461 = vmatpush1.msra.mxu0 0.0
    %462 = vmatprep.subr.mxu0 0.0
    %463 = vmatpush1.msra.mxu0 0.0
    %464 = vmatprep.subr.mxu0 0.0
    %465 = vmatpush1.msra.mxu0 0.0
    %466 = vmatprep.subr.mxu0 0.0
    %467 = vmatpush1.msra.mxu0 0.0
    %468 = vmatprep.subr.mxu0 0.0
    %469 = vmatpush1.msra.mxu0 0.0
    %470 = vmatprep.subr.mxu0 0.0
    %471 = vmatpush1.msra.mxu0 0.0
    %472 = vmatprep.subr.mxu0 0.0
    %473 = vmatpush1.msra.mxu0 0.0
    %474 = vmatprep.subr.mxu0 0.0
    %475 = vmatpush1.msra.mxu0 0.0
    %476 = vmatprep.subr.mxu0 0.0
    %477 = vmatpush1.msra.mxu0 0.0
    %478 = vmatprep.subr.mxu0 0.0
    %479 = vmatpush1.msra.mxu0 0.0
    %480 = vmatprep.subr.mxu0 0.0
    %481 = vmatpush1.msra.mxu0 0.0
    %482 = vmatprep.subr.mxu0 0.0
    %483 = vmatpush1.msra.mxu0 0.0
    %484 = vmatprep.subr.mxu0 0.0
    %485 = vmatpush1.msra.mxu0 0.0
    %486 = vmatprep.subr.mxu0 0.0
    %487 = vmatpush1.msra.mxu0 0.0
    %488 = vmatprep.subr.mxu0 0.0
    %489 = vmatpush1.msra.mxu0 0.0
    %490 = vmatprep.subr.mxu0 0.0
    %491 = vmatpush1.msra.mxu0 0.0
    %492 = vmatprep.subr.mxu0 0.0
    %493 = vmatpush1.msra.mxu0 0.0
    %494 = vmatprep.subr.mxu0 0.0
    %495 = vmatpush1.msra.mxu0 0.0
    %496 = vmatprep.subr.mxu0 0.0
    %497 = vmatpush1.msra.mxu0 0.0
    %498 = vmatprep.subr.mxu0 0.0
    %499 = vmatpush1.msra.mxu0 0.0
    %500 = vmatprep.subr.mxu0 0.0
    %501 = vmatpush1.msra.mxu0 0.0
    %502 = vmatprep.mubr.f32.mxu0 0.0
    %503 = vmatmul.mubr.f32.gmra.mrb[0].mxu0 %v213
    %v504 = vpop.f32.mrb[0].mxu0
    %v505 = vadd.f32 0.0, %v504
    %v506 = vpop.f32.mrb[0].mxu0
    %507 = vdwg.mxu0
    %v508 = vadd.f32 %v435, %v505
    %v509 = vtanh.pop %v508
    %v511 = vsel %vm211, %v361, 0
    %513 = vmatprep.subr.mxu0 0.0
    %514 = vmatpush1.msra.mxu0 %v57
    %515 = vmatprep.subr.mxu0 0.0
    %516 = vmatpush1.msra.mxu0 %v58
    %517 = vmatprep.subr.mxu0 0.0
    %518 = vmatpush1.msra.mxu0 %v59
    %519 = vmatprep.subr.mxu0 0.0
    %520 = vmatpush1.msra.mxu0 %v60
    %521 = vmatprep.subr.mxu0 0.0
    %522 = vmatpush1.msra.mxu0 0.0
    %523 = vmatprep.subr.mxu0 0.0
    %524 = vmatpush1.msra.mxu0 0.0
    %525 = vmatprep.subr.mxu0 0.0
    %526 = vmatpush1.msra.mxu0 0.0
    %527 = vmatprep.subr.mxu0 0.0
    %528 = vmatpush1.msra.mxu0 0.0
    %529 = vmatprep.subr.mxu0 0.0
    %530 = vmatpush1.msra.mxu0 0.0
    %531 = vmatprep.subr.mxu0 0.0
    %532 = vmatpush1.msra.mxu0 0.0
    %533 = vmatprep.subr.mxu0 0.0
    %534 = vmatpush1.msra.mxu0 0.0
    %535 = vmatprep.subr.mxu0 0.0
    %536 = vmatpush1.msra.mxu0 0.0
    %537 = vmatprep.subr.mxu0 0.0
    %538 = vmatpush1.msra.mxu0 0.0
    %539 = vmatprep.subr.mxu0 0.0
    %540 = vmatpush1.msra.mxu0 0.0
    %541 = vmatprep.subr.mxu0 0.0
    %542 = vmatpush1.msra.mxu0 0.0
    %543 = vmatprep.subr.mxu0 0.0
    %544 = vmatpush1.msra.mxu0 0.0
    %545 = vmatprep.subr.mxu0 0.0
    %546 = vmatpush1.msra.mxu0 0.0
    %547 = vmatprep.subr.mxu0 0.0
    %548 = vmatpush1.msra.mxu0 0.0
    %549 = vmatprep.subr.mxu0 0.0
    %550 = vmatpush1.msra.mxu0 0.0
    %551 = vmatprep.subr.mxu0 0.0
    %552 = vmatpush1.msra.mxu0 0.0
    %553 = vmatprep.subr.mxu0 0.0
    %554 = vmatpush1.msra.mxu0 0.0
    %555 = vmatprep.subr.mxu0 0.0
    %556 = vmatpush1.msra.mxu0 0.0
    %557 = vmatprep.subr.mxu0 0.0
    %558 = vmatpush1.msra.mxu0 0.0
    %559 = vmatprep.subr.mxu0 0.0
    %560 = vmatpush1.msra.mxu0 0.0
    %561 = vmatprep.subr.mxu0 0.0
    %562 = vmatpush1.msra.mxu0 0.0
    %563 = vmatprep.subr.mxu0 0.0
    %564 = vmatpush1.msra.mxu0 0.0
    %565 = vmatprep.subr.mxu0 0.0
    %566 = vmatpush1.msra.mxu0 0.0
    %567 = vmatprep.subr.mxu0 0.0
    %568 = vmatpush1.msra.mxu0 0.0
    %569 = vmatprep.subr.mxu0 0.0
    %570 = vmatpush1.msra.mxu0 0.0
    %571 = vmatprep.subr.mxu0 0.0
    %572 = vmatpush1.msra.mxu0 0.0
    %573 = vmatprep.subr.mxu0 0.0
    %574 = vmatpush1.msra.mxu0 0.0
    %575 = vmatprep.subr.mxu0 0.0
    %576 = vmatpush1.msra.mxu0 0.0
    %577 = vmatprep.mubr.f32.mxu0 0.0
    %578 = vmatmul.mubr.f32.gmra.mrb[0].mxu0 %v511
    %v579 = vpop.f32.mrb[0].mxu0
    %v580 = vadd.f32 0.0, %v579
    %v581 = vpop.f32.mrb[0].mxu0
    %582 = vdwg.mxu0
    %v583 = vadd.f32 %v183, %v580
    %v584 = vtanh.pop %v583
    %585 = vmatprep.subr.mxu0 0.0
    %586 = vmatpush1.msra.mxu0 %v53
    %587 = vmatprep.subr.mxu0 0.0
    %588 = vmatpush1.msra.mxu0 %v54
    %589 = vmatprep.subr.mxu0 0.0
    %590 = vmatpush1.msra.mxu0 %v55
    %591 = vmatprep.subr.mxu0 0.0
    %592 = vmatpush1.msra.mxu0 %v56
    %593 = vmatprep.subr.mxu0 0.0
    %594 = vmatpush1.msra.mxu0 0.0
    %595 = vmatprep.subr.mxu0 0.0
    %596 = vmatpush1.msra.mxu0 0.0
    %597 = vmatprep.subr.mxu0 0.0
    %598 = vmatpush1.msra.mxu0 0.0
    %599 = vmatprep.subr.mxu0 0.0
    %600 = vmatpush1.msra.mxu0 0.0
    %601 = vmatprep.subr.mxu0 0.0
    %602 = vmatpush1.msra.mxu0 0.0
    %603 = vmatprep.subr.mxu0 0.0
    %604 = vmatpush1.msra.mxu0 0.0
    %605 = vmatprep.subr.mxu0 0.0
    %606 = vmatpush1.msra.mxu0 0.0
    %607 = vmatprep.subr.mxu0 0.0
    %608 = vmatpush1.msra.mxu0 0.0
    %609 = vmatprep.subr.mxu0 0.0
    %610 = vmatpush1.msra.mxu0 0.0
    %611 = vmatprep.subr.mxu0 0.0
    %612 = vmatpush1.msra.mxu0 0.0
    %613 = vmatprep.subr.mxu0 0.0
    %614 = vmatpush1.msra.mxu0 0.0
    %615 = vmatprep.subr.mxu0 0.0
    %616 = vmatpush1.msra.mxu0 0.0
    %617 = vmatprep.subr.mxu0 0.0
    %618 = vmatpush1.msra.mxu0 0.0
    %619 = vmatprep.subr.mxu0 0.0
    %620 = vmatpush1.msra.mxu0 0.0
    %621 = vmatprep.subr.mxu0 0.0
    %622 = vmatpush1.msra.mxu0 0.0
    %623 = vmatprep.subr.mxu0 0.0
    %624 = vmatpush1.msra.mxu0 0.0
    %625 = vmatprep.subr.mxu0 0.0
    %626 = vmatpush1.msra.mxu0 0.0
    %627 = vmatprep.subr.mxu0 0.0
    %628 = vmatpush1.msra.mxu0 0.0
    %629 = vmatprep.subr.mxu0 0.0
    %630 = vmatpush1.msra.mxu0 0.0
    %631 = vmatprep.subr.mxu0 0.0
    %632 = vmatpush1.msra.mxu0 0.0
    %633 = vmatprep.subr.mxu0 0.0
    %634 = vmatpush1.msra.mxu0 0.0
    %635 = vmatprep.subr.mxu0 0.0
    %636 = vmatpush1.msra.mxu0 0.0
    %637 = vmatprep.subr.mxu0 0.0
    %638 = vmatpush1.msra.mxu0 0.0
    %639 = vmatprep.subr.mxu0 0.0
    %640 = vmatpush1.msra.mxu0 0.0
    %641 = vmatprep.subr.mxu0 0.0
    %642 = vmatpush1.msra.mxu0 0.0
    %643 = vmatprep.subr.mxu0 0.0
    %644 = vmatpush1.msra.mxu0 0.0
    %645 = vmatprep.subr.mxu0 0.0
    %646 = vmatpush1.msra.mxu0 0.0
    %647 = vmatprep.subr.mxu0 0.0
    %648 = vmatpush1.msra.mxu0 0.0
    %649 = vmatprep.mubr.f32.mxu0 0.0
    %650 = vmatmul.mubr.f32.gmra.mrb[0].mxu0 %v511
    %v651 = vpop.f32.mrb[0].mxu0
    %v652 = vadd.f32 %v366, %v651
    %v653 = vpop.f32.mrb[0].mxu0
    %654 = vdwg.mxu0
    %v656 = vsel %vm211, %v509, 0
    %658 = vmatprep.subr.mxu0 0.0
    %659 = vmatpush1.msra.mxu0 %v61
    %660 = vmatprep.subr.mxu0 0.0
    %661 = vmatpush1.msra.mxu0 %v62
    %662 = vmatprep.subr.mxu0 0.0
    %663 = vmatpush1.msra.mxu0 %v63
    %664 = vmatprep.subr.mxu0 0.0
    %665 = vmatpush1.msra.mxu0 %v64
    %666 = vmatprep.subr.mxu0 0.0
    %667 = vmatpush1.msra.mxu0 0.0
    %668 = vmatprep.subr.mxu0 0.0
    %669 = vmatpush1.msra.mxu0 0.0
    %670 = vmatprep.subr.mxu0 0.0
    %671 = vmatpush1.msra.mxu0 0.0
    %672 = vmatprep.subr.mxu0 0.0
    %673 = vmatpush1.msra.mxu0 0.0
    %674 = vmatprep.subr.mxu0 0.0
    %675 = vmatpush1.msra.mxu0 0.0
    %676 = vmatprep.subr.mxu0 0.0
    %677 = vmatpush1.msra.mxu0 0.0
    %678 = vmatprep.subr.mxu0 0.0
    %679 = vmatpush1.msra.mxu0 0.0
    %680 = vmatprep.subr.mxu0 0.0
    %681 = vmatpush1.msra.mxu0 0.0
    %682 = vmatprep.subr.mxu0 0.0
    %683 = vmatpush1.msra.mxu0 0.0
    %684 = vmatprep.subr.mxu0 0.0
    %685 = vmatpush1.msra.mxu0 0.0
    %686 = vmatprep.subr.mxu0 0.0
    %687 = vmatpush1.msra.mxu0 0.0
    %688 = vmatprep.subr.mxu0 0.0
    %689 = vmatpush1.msra.mxu0 0.0
    %690 = vmatprep.subr.mxu0 0.0
    %691 = vmatpush1.msra.mxu0 0.0
    %692 = vmatprep.subr.mxu0 0.0
    %693 = vmatpush1.msra.mxu0 0.0
    %694 = vmatprep.subr.mxu0 0.0
    %695 = vmatpush1.msra.mxu0 0.0
    %696 = vmatprep.subr.mxu0 0.0
    %697 = vmatpush1.msra.mxu0 0.0
    %698 = vmatprep.subr.mxu0 0.0
    %699 = vmatpush1.msra.mxu0 0.0
    %700 = vmatprep.subr.mxu0 0.0
    %701 = vmatpush1.msra.mxu0 0.0
    %702 = vmatprep.subr.mxu0 0.0
    %703 = vmatpush1.msra.mxu0 0.0
    %704 = vmatprep.subr.mxu0 0.0
    %705 = vmatpush1.msra.mxu0 0.0
    %706 = vmatprep.subr.mxu0 0.0
    %707 = vmatpush1.msra.mxu0 0.0
    %708 = vmatprep.subr.mxu0 0.0
    %709 = vmatpush1.msra.mxu0 0.0
    %710 = vmatprep.subr.mxu0 0.0
    %711 = vmatpush1.msra.mxu0 0.0
    %712 = vmatprep.subr.mxu0 0.0
    %713 = vmatpush1.msra.mxu0 0.0
    %714 = vmatprep.subr.mxu0 0.0
    %715 = vmatpush1.msra.mxu0 0.0
    %716 = vmatprep.subr.mxu0 0.0
    %717 = vmatpush1.msra.mxu0 0.0
    %718 = vmatprep.subr.mxu0 0.0
    %719 = vmatpush1.msra.mxu0 0.0
    %720 = vmatprep.subr.mxu0 0.0
    %721 = vmatpush1.msra.mxu0 0.0
    %722 = vmatprep.mubr.f32.mxu0 0.0
    %723 = vmatmul.mubr.f32.gmra.mrb[0].mxu0 %v656
    %v724 = vpop.f32.mrb[0].mxu0
    %v725 = vadd.f32 0.0, %v724
    %v726 = vpop.f32.mrb[0].mxu0
    %727 = vdwg.mxu0
    %v728 = vadd.f32 %v652, %v725
    %v729 = vtanh.pop %v728
    %v731 = vsel %vm211, %v584, 0
    %733 = vmatprep.subr.mxu0 0.0
    %734 = vmatpush1.msra.mxu0 %v57
    %735 = vmatprep.subr.mxu0 0.0
    %736 = vmatpush1.msra.mxu0 %v58
    %737 = vmatprep.subr.mxu0 0.0
    %738 = vmatpush1.msra.mxu0 %v59
    %739 = vmatprep.subr.mxu0 0.0
    %740 = vmatpush1.msra.mxu0 %v60
    %741 = vmatprep.subr.mxu0 0.0
    %742 = vmatpush1.msra.mxu0 0.0
    %743 = vmatprep.subr.mxu0 0.0
    %744 = vmatpush1.msra.mxu0 0.0
    %745 = vmatprep.subr.mxu0 0.0
    %746 = vmatpush1.msra.mxu0 0.0
    %747 = vmatprep.subr.mxu0 0.0
    %748 = vmatpush1.msra.mxu0 0.0
    %749 = vmatprep.subr.mxu0 0.0
    %750 = vmatpush1.msra.mxu0 0.0
    %751 = vmatprep.subr.mxu0 0.0
    %752 = vmatpush1.msra.mxu0 0.0
    %753 = vmatprep.subr.mxu0 0.0
    %754 = vmatpush1.msra.mxu0 0.0
    %755 = vmatprep.subr.mxu0 0.0
    %756 = vmatpush1.msra.mxu0 0.0
    %757 = vmatprep.subr.mxu0 0.0
    %758 = vmatpush1.msra.mxu0 0.0
    %759 = vmatprep.subr.mxu0 0.0
    %760 = vmatpush1.msra.mxu0 0.0
    %761 = vmatprep.subr.mxu0 0.0
    %762 = vmatpush1.msra.mxu0 0.0
    %763 = vmatprep.subr.mxu0 0.0
    %764 = vmatpush1.msra.mxu0 0.0
    %765 = vmatprep.subr.mxu0 0.0
    %766 = vmatpush1.msra.mxu0 0.0
    %767 = vmatprep.subr.mxu0 0.0
    %768 = vmatpush1.msra.mxu0 0.0
    %769 = vmatprep.subr.mxu0 0.0
    %770 = vmatpush1.msra.mxu0 0.0
    %771 = vmatprep.subr.mxu0 0.0
    %772 = vmatpush1.msra.mxu0 0.0
    %773 = vmatprep.subr.mxu0 0.0
    %774 = vmatpush1.msra.mxu0 0.0
    %775 = vmatprep.subr.mxu0 0.0
    %776 = vmatpush1.msra.mxu0 0.0
    %777 = vmatprep.subr.mxu0 0.0
    %778 = vmatpush1.msra.mxu0 0.0
    %779 = vmatprep.subr.mxu0 0.0
    %780 = vmatpush1.msra.mxu0 0.0
    %781 = vmatprep.subr.mxu0 0.0
    %782 = vmatpush1.msra.mxu0 0.0
    %783 = vmatprep.subr.mxu0 0.0
    %784 = vmatpush1.msra.mxu0 0.0
    %785 = vmatprep.subr.mxu0 0.0
    %786 = vmatpush1.msra.mxu0 0.0
    %787 = vmatprep.subr.mxu0 0.0
    %788 = vmatpush1.msra.mxu0 0.0
    %789 = vmatprep.subr.mxu0 0.0
    %790 = vmatpush1.msra.mxu0 0.0
    %791 = vmatprep.subr.mxu0 0.0
    %792 = vmatpush1.msra.mxu0 0.0
    %793 = vmatprep.subr.mxu0 0.0
    %794 = vmatpush1.msra.mxu0 0.0
    %795 = vmatprep.subr.mxu0 0.0
    %796 = vmatpush1.msra.mxu0 0.0
    %797 = vmatprep.mubr.f32.mxu0 0.0
    %798 = vmatmul.mubr.f32.gmra.mrb[0].mxu0 %v731
    %v799 = vpop.f32.mrb[0].mxu0
    %v800 = vadd.f32 0.0, %v799
    %v801 = vpop.f32.mrb[0].mxu0
    %802 = vdwg.mxu0
    %v803 = vadd.f32 %v188, %v800
    %v804 = vtanh.pop %v803
    %805 = vmatprep.subr.mxu0 0.0
    %806 = vmatpush1.msra.mxu0 %v53
    %807 = vmatprep.subr.mxu0 0.0
    %808 = vmatpush1.msra.mxu0 %v54
    %809 = vmatprep.subr.mxu0 0.0
    %810 = vmatpush1.msra.mxu0 %v55
    %811 = vmatprep.subr.mxu0 0.0
    %812 = vmatpush1.msra.mxu0 %v56
    %813 = vmatprep.subr.mxu0 0.0
    %814 = vmatpush1.msra.mxu0 0.0
    %815 = vmatprep.subr.mxu0 0.0
    %816 = vmatpush1.msra.mxu0 0.0
    %817 = vmatprep.subr.mxu0 0.0
    %818 = vmatpush1.msra.mxu0 0.0
    %819 = vmatprep.subr.mxu0 0.0
    %820 = vmatpush1.msra.mxu0 0.0
    %821 = vmatprep.subr.mxu0 0.0
    %822 = vmatpush1.msra.mxu0 0.0
    %823 = vmatprep.subr.mxu0 0.0
    %824 = vmatpush1.msra.mxu0 0.0
    %825 = vmatprep.subr.mxu0 0.0
    %826 = vmatpush1.msra.mxu0 0.0
    %827 = vmatprep.subr.mxu0 0.0
    %828 = vmatpush1.msra.mxu0 0.0
    %829 = vmatprep.subr.mxu0 0.0
    %830 = vmatpush1.msra.mxu0 0.0
    %831 = vmatprep.subr.mxu0 0.0
    %832 = vmatpush1.msra.mxu0 0.0
    %833 = vmatprep.subr.mxu0 0.0
    %834 = vmatpush1.msra.mxu0 0.0
    %835 = vmatprep.subr.mxu0 0.0
    %836 = vmatpush1.msra.mxu0 0.0
    %837 = vmatprep.subr.mxu0 0.0
    %838 = vmatpush1.msra.mxu0 0.0
    %839 = vmatprep.subr.mxu0 0.0
    %840 = vmatpush1.msra.mxu0 0.0
    %841 = vmatprep.subr.mxu0 0.0
    %842 = vmatpush1.msra.mxu0 0.0
    %843 = vmatprep.subr.mxu0 0.0
    %844 = vmatpush1.msra.mxu0 0.0
    %845 = vmatprep.subr.mxu0 0.0
    %846 = vmatpush1.msra.mxu0 0.0
    %847 = vmatprep.subr.mxu0 0.0
    %848 = vmatpush1.msra.mxu0 0.0
    %849 = vmatprep.subr.mxu0 0.0
    %850 = vmatpush1.msra.mxu0 0.0
    %851 = vmatprep.subr.mxu0 0.0
    %852 = vmatpush1.msra.mxu0 0.0
    %853 = vmatprep.subr.mxu0 0.0
    %854 = vmatpush1.msra.mxu0 0.0
    %855 = vmatprep.subr.mxu0 0.0
    %856 = vmatpush1.msra.mxu0 0.0
    %857 = vmatprep.subr.mxu0 0.0
    %858 = vmatpush1.msra.mxu0 0.0
    %859 = vmatprep.subr.mxu0 0.0
    %860 = vmatpush1.msra.mxu0 0.0
    %861 = vmatprep.subr.mxu0 0.0
    %862 = vmatpush1.msra.mxu0 0.0
    %863 = vmatprep.subr.mxu0 0.0
    %864 = vmatpush1.msra.mxu0 0.0
    %865 = vmatprep.subr.mxu0 0.0
    %866 = vmatpush1.msra.mxu0 0.0
    %867 = vmatprep.subr.mxu0 0.0
    %868 = vmatpush1.msra.mxu0 0.0
    %869 = vmatprep.mubr.f32.mxu0 0.0
    %870 = vmatmul.mubr.f32.gmra.mrb[0].mxu0 %v731
    %v871 = vpop.f32.mrb[0].mxu0
    %v872 = vadd.f32 %v366, %v871
    %v873 = vpop.f32.mrb[0].mxu0
    %874 = vdwg.mxu0
    %v876 = vsel %vm211, %v729, 0
    %878 = vmatprep.subr.mxu0 0.0
    %879 = vmatpush1.msra.mxu0 %v61
    %880 = vmatprep.subr.mxu0 0.0
    %881 = vmatpush1.msra.mxu0 %v62
    %882 = vmatprep.subr.mxu0 0.0
    %883 = vmatpush1.msra.mxu0 %v63
    %884 = vmatprep.subr.mxu0 0.0
    %885 = vmatpush1.msra.mxu0 %v64
    %886 = vmatprep.subr.mxu0 0.0
    %887 = vmatpush1.msra.mxu0 0.0
    %888 = vmatprep.subr.mxu0 0.0
    %889 = vmatpush1.msra.mxu0 0.0
    %890 = vmatprep.subr.mxu0 0.0
    %891 = vmatpush1.msra.mxu0 0.0
    %892 = vmatprep.subr.mxu0 0.0
    %893 = vmatpush1.msra.mxu0 0.0
    %894 = vmatprep.subr.mxu0 0.0
    %895 = vmatpush1.msra.mxu0 0.0
    %896 = vmatprep.subr.mxu0 0.0
    %897 = vmatpush1.msra.mxu0 0.0
    %898 = vmatprep.subr.mxu0 0.0
    %899 = vmatpush1.msra.mxu0 0.0
    %900 = vmatprep.subr.mxu0 0.0
    %901 = vmatpush1.msra.mxu0 0.0
    %902 = vmatprep.subr.mxu0 0.0
    %903 = vmatpush1.msra.mxu0 0.0
    %904 = vmatprep.subr.mxu0 0.0
    %905 = vmatpush1.msra.mxu0 0.0
    %906 = vmatprep.subr.mxu0 0.0
    %907 = vmatpush1.msra.mxu0 0.0
    %908 = vmatprep.subr.mxu0 0.0
    %909 = vmatpush1.msra.mxu0 0.0
    %910 = vmatprep.subr.mxu0 0.0
    %911 = vmatpush1.msra.mxu0 0.0
    %912 = vmatprep.subr.mxu0 0.0
    %913 = vmatpush1.msra.mxu0 0.0
    %914 = vmatprep.subr.mxu0 0.0
    %915 = vmatpush1.msra.mxu0 0.0
    %916 = vmatprep.subr.mxu0 0.0
    %917 = vmatpush1.msra.mxu0 0.0
    %918 = vmatprep.subr.mxu0 0.0
    %919 = vmatpush1.msra.mxu0 0.0
    %920 = vmatprep.subr.mxu0 0.0
    %921 = vmatpush1.msra.mxu0 0.0
    %922 = vmatprep.subr.mxu0 0.0
    %923 = vmatpush1.msra.mxu0 0.0
    %924 = vmatprep.subr.mxu0 0.0
    %925 = vmatpush1.msra.mxu0 0.0
    %926 = vmatprep.subr.mxu0 0.0
    %927 = vmatpush1.msra.mxu0 0.0
    %928 = vmatprep.subr.mxu0 0.0
    %929 = vmatpush1.msra.mxu0 0.0
    %930 = vmatprep.subr.mxu0 0.0
    %931 = vmatpush1.msra.mxu0 0.0
    %932 = vmatprep.subr.mxu0 0.0
    %933 = vmatpush1.msra.mxu0 0.0
    %934 = vmatprep.subr.mxu0 0.0
    %935 = vmatpush1.msra.mxu0 0.0
    %936 = vmatprep.subr.mxu0 0.0
    %937 = vmatpush1.msra.mxu0 0.0
    %938 = vmatprep.subr.mxu0 0.0
    %939 = vmatpush1.msra.mxu0 0.0
    %940 = vmatprep.subr.mxu0 0.0
    %941 = vmatpush1.msra.mxu0 0.0
    %942 = vmatprep.mubr.f32.mxu0 0.0
    %943 = vmatmul.mubr.f32.gmra.mrb[0].mxu0 %v876
    %v944 = vpop.f32.mrb[0].mxu0
    %v945 = vadd.f32 0.0, %v944
    %v946 = vpop.f32.mrb[0].mxu0
    %947 = vdwg.mxu0
    %v948 = vadd.f32 %v872, %v945
    %v949 = vtanh.pop %v948
    %v951 = vsel %vm211, %v804, 0
    %953 = vmatprep.subr.mxu0 0.0
    %954 = vmatpush1.msra.mxu0 %v57
    %955 = vmatprep.subr.mxu0 0.0
    %956 = vmatpush1.msra.mxu0 %v58
    %957 = vmatprep.subr.mxu0 0.0
    %958 = vmatpush1.msra.mxu0 %v59
    %959 = vmatprep.subr.mxu0 0.0
    %960 = vmatpush1.msra.mxu0 %v60
    %961 = vmatprep.subr.mxu0 0.0
    %962 = vmatpush1.msra.mxu0 0.0
    %963 = vmatprep.subr.mxu0 0.0
    %964 = vmatpush1.msra.mxu0 0.0
    %965 = vmatprep.subr.mxu0 0.0
    %966 = vmatpush1.msra.mxu0 0.0
    %967 = vmatprep.subr.mxu0 0.0
    %968 = vmatpush1.msra.mxu0 0.0
    %969 = vmatprep.subr.mxu0 0.0
    %970 = vmatpush1.msra.mxu0 0.0
    %971 = vmatprep.subr.mxu0 0.0
    %972 = vmatpush1.msra.mxu0 0.0
    %973 = vmatprep.subr.mxu0 0.0
    %974 = vmatpush1.msra.mxu0 0.0
    %975 = vmatprep.subr.mxu0 0.0
    %976 = vmatpush1.msra.mxu0 0.0
    %977 = vmatprep.subr.mxu0 0.0
    %978 = vmatpush1.msra.mxu0 0.0
    %979 = vmatprep.subr.mxu0 0.0
    %980 = vmatpush1.msra.mxu0 0.0
    %981 = vmatprep.subr.mxu0 0.0
    %982 = vmatpush1.msra.mxu0 0.0
    %983 = vmatprep.subr.mxu0 0.0
    %984 = vmatpush1.msra.mxu0 0.0
    %985 = vmatprep.subr.mxu0 0.0
    %986 = vmatpush1.msra.mxu0 0.0
    %987 = vmatprep.subr.mxu0 0.0
    %988 = vmatpush1.msra.mxu0 0.0
    %989 = vmatprep.subr.mxu0 0.0
    %990 = vmatpush1.msra.mxu0 0.0
    %991 = vmatprep.subr.mxu0 0.0
    %992 = vmatpush1.msra.mxu0 0.0
    %993 = vmatprep.subr.mxu0 0.0
    %994 = vmatpush1.msra.mxu0 0.0
    %995 = vmatprep.subr.mxu0 0.0
    %996 = vmatpush1.msra.mxu0 0.0
    %997 = vmatprep.subr.mxu0 0.0
    %998 = vmatpush1.msra.mxu0 0.0
    %999 = vmatprep.subr.mxu0 0.0
    %1000 = vmatpush1.msra.mxu0 0.0
    %1001 = vmatprep.subr.mxu0 0.0
    %1002 = vmatpush1.msra.mxu0 0.0
    %1003 = vmatprep.subr.mxu0 0.0
    %1004 = vmatpush1.msra.mxu0 0.0
    %1005 = vmatprep.subr.mxu0 0.0
    %1006 = vmatpush1.msra.mxu0 0.0
    %1007 = vmatprep.subr.mxu0 0.0
    %1008 = vmatpush1.msra.mxu0 0.0
    %1009 = vmatprep.subr.mxu0 0.0
    %1010 = vmatpush1.msra.mxu0 0.0
    %1011 = vmatprep.subr.mxu0 0.0
    %1012 = vmatpush1.msra.mxu0 0.0
    %1013 = vmatprep.subr.mxu0 0.0
    %1014 = vmatpush1.msra.mxu0 0.0
    %1015 = vmatprep.subr.mxu0 0.0
    %1016 = vmatpush1.msra.mxu0 0.0
    %1017 = vmatprep.mubr.f32.mxu0 0.0
    %1018 = vmatmul.mubr.f32.gmra.mrb[0].mxu0 %v951
    %v1019 = vpop.f32.mrb[0].mxu0
    %v1020 = vadd.f32 0.0, %v1019
    %v1021 = vpop.f32.mrb[0].mxu0
    %1022 = vdwg.mxu0
    %v1023 = vadd.f32 %v193, %v1020
    %v1024 = vtanh.pop %v1023
    %1025 = vmatprep.subr.mxu0 0.0
    %1026 = vmatpush1.msra.mxu0 %v53
    %1027 = vmatprep.subr.mxu0 0.0
    %1028 = vmatpush1.msra.mxu0 %v54
    %1029 = vmatprep.subr.mxu0 0.0
    %1030 = vmatpush1.msra.mxu0 %v55
    %1031 = vmatprep.subr.mxu0 0.0
    %1032 = vmatpush1.msra.mxu0 %v56
    %1033 = vmatprep.subr.mxu0 0.0
    %1034 = vmatpush1.msra.mxu0 0.0
    %1035 = vmatprep.subr.mxu0 0.0
    %1036 = vmatpush1.msra.mxu0 0.0
    %1037 = vmatprep.subr.mxu0 0.0
    %1038 = vmatpush1.msra.mxu0 0.0
    %1039 = vmatprep.subr.mxu0 0.0
    %1040 = vmatpush1.msra.mxu0 0.0
    %1041 = vmatprep.subr.mxu0 0.0
    %1042 = vmatpush1.msra.mxu0 0.0
    %1043 = vmatprep.subr.mxu0 0.0
    %1044 = vmatpush1.msra.mxu0 0.0
    %1045 = vmatprep.subr.mxu0 0.0
    %1046 = vmatpush1.msra.mxu0 0.0
    %1047 = vmatprep.subr.mxu0 0.0
    %1048 = vmatpush1.msra.mxu0 0.0
    %1049 = vmatprep.subr.mxu0 0.0
    %1050 = vmatpush1.msra.mxu0 0.0
    %1051 = vmatprep.subr.mxu0 0.0
    %1052 = vmatpush1.msra.mxu0 0.0
    %1053 = vmatprep.subr.mxu0 0.0
    %1054 = vmatpush1.msra.mxu0 0.0
    %1055 = vmatprep.subr.mxu0 0.0
    %1056 = vmatpush1.msra.mxu0 0.0
    %1057 = vmatprep.subr.mxu0 0.0
    %1058 = vmatpush1.msra.mxu0 0.0
    %1059 = vmatprep.subr.mxu0 0.0
    %1060 = vmatpush1.msra.mxu0 0.0
    %1061 = vmatprep.subr.mxu0 0.0
    %1062 = vmatpush1.msra.mxu0 0.0
    %1063 = vmatprep.subr.mxu0 0.0
    %1064 = vmatpush1.msra.mxu0 0.0
    %1065 = vmatprep.subr.mxu0 0.0
    %1066 = vmatpush1.msra.mxu0 0.0
    %1067 = vmatprep.subr.mxu0 0.0
    %1068 = vmatpush1.msra.mxu0 0.0
    %1069 = vmatprep.subr.mxu0 0.0
    %1070 = vmatpush1.msra.mxu0 0.0
    %1071 = vmatprep.subr.mxu0 0.0
    %1072 = vmatpush1.msra.mxu0 0.0
    %1073 = vmatprep.subr.mxu0 0.0
    %1074 = vmatpush1.msra.mxu0 0.0
    %1075 = vmatprep.subr.mxu0 0.0
    %1076 = vmatpush1.msra.mxu0 0.0
    %1077 = vmatprep.subr.mxu0 0.0
    %1078 = vmatpush1.msra.mxu0 0.0
    %1079 = vmatprep.subr.mxu0 0.0
    %1080 = vmatpush1.msra.mxu0 0.0
    %1081 = vmatprep.subr.mxu0 0.0
    %1082 = vmatpush1.msra.mxu0 0.0
    %1083 = vmatprep.subr.mxu0 0.0
    %1084 = vmatpush1.msra.mxu0 0.0
    %1085 = vmatprep.subr.mxu0 0.0
    %1086 = vmatpush1.msra.mxu0 0.0
    %1087 = vmatprep.subr.mxu0 0.0
    %1088 = vmatpush1.msra.mxu0 0.0
    %1089 = vmatprep.mubr.f32.mxu0 0.0
    %1090 = vmatmul.mubr.f32.gmra.mrb[0].mxu0 %v951
    %v1091 = vpop.f32.mrb[0].mxu0
    %v1092 = vadd.f32 %v366, %v1091
    %v1093 = vpop.f32.mrb[0].mxu0
    %1094 = vdwg.mxu0
    %v1096 = vsel %vm211, %v949, 0
    %1098 = vmatprep.subr.mxu0 0.0
    %1099 = vmatpush1.msra.mxu0 %v61
    %1100 = vmatprep.subr.mxu0 0.0
    %1101 = vmatpush1.msra.mxu0 %v62
    %1102 = vmatprep.subr.mxu0 0.0
    %1103 = vmatpush1.msra.mxu0 %v63
    %1104 = vmatprep.subr.mxu0 0.0
    %1105 = vmatpush1.msra.mxu0 %v64
    %1106 = vmatprep.subr.mxu0 0.0
    %1107 = vmatpush1.msra.mxu0 0.0
    %1108 = vmatprep.subr.mxu0 0.0
    %1109 = vmatpush1.msra.mxu0 0.0
    %1110 = vmatprep.subr.mxu0 0.0
    %1111 = vmatpush1.msra.mxu0 0.0
    %1112 = vmatprep.subr.mxu0 0.0
    %1113 = vmatpush1.msra.mxu0 0.0
    %1114 = vmatprep.subr.mxu0 0.0
    %1115 = vmatpush1.msra.mxu0 0.0
    %1116 = vmatprep.subr.mxu0 0.0
    %1117 = vmatpush1.msra.mxu0 0.0
    %1118 = vmatprep.subr.mxu0 0.0
    %1119 = vmatpush1.msra.mxu0 0.0
    %1120 = vmatprep.subr.mxu0 0.0
    %1121 = vmatpush1.msra.mxu0 0.0
    %1122 = vmatprep.subr.mxu0 0.0
    %1123 = vmatpush1.msra.mxu0 0.0
    %1124 = vmatprep.subr.mxu0 0.0
    %1125 = vmatpush1.msra.mxu0 0.0
    %1126 = vmatprep.subr.mxu0 0.0
    %1127 = vmatpush1.msra.mxu0 0.0
    %1128 = vmatprep.subr.mxu0 0.0
    %1129 = vmatpush1.msra.mxu0 0.0
    %1130 = vmatprep.subr.mxu0 0.0
    %1131 = vmatpush1.msra.mxu0 0.0
    %1132 = vmatprep.subr.mxu0 0.0
    %1133 = vmatpush1.msra.mxu0 0.0
    %1134 = vmatprep.subr.mxu0 0.0
    %1135 = vmatpush1.msra.mxu0 0.0
    %1136 = vmatprep.subr.mxu0 0.0
    %1137 = vmatpush1.msra.mxu0 0.0
    %1138 = vmatprep.subr.mxu0 0.0
    %1139 = vmatpush1.msra.mxu0 0.0
    %1140 = vmatprep.subr.mxu0 0.0
    %1141 = vmatpush1.msra.mxu0 0.0
    %1142 = vmatprep.subr.mxu0 0.0
    %1143 = vmatpush1.msra.mxu0 0.0
    %1144 = vmatprep.subr.mxu0 0.0
    %1145 = vmatpush1.msra.mxu0 0.0
    %1146 = vmatprep.subr.mxu0 0.0
    %1147 = vmatpush1.msra.mxu0 0.0
    %1148 = vmatprep.subr.mxu0 0.0
    %1149 = vmatpush1.msra.mxu0 0.0
    %1150 = vmatprep.subr.mxu0 0.0
    %1151 = vmatpush1.msra.mxu0 0.0
    %1152 = vmatprep.subr.mxu0 0.0
    %1153 = vmatpush1.msra.mxu0 0.0
    %1154 = vmatprep.subr.mxu0 0.0
    %1155 = vmatpush1.msra.mxu0 0.0
    %1156 = vmatprep.subr.mxu0 0.0
    %1157 = vmatpush1.msra.mxu0 0.0
    %1158 = vmatprep.subr.mxu0 0.0
    %1159 = vmatpush1.msra.mxu0 0.0
    %1160 = vmatprep.subr.mxu0 0.0
    %1161 = vmatpush1.msra.mxu0 0.0
    %1162 = vmatprep.mubr.f32.mxu0 0.0
    %1163 = vmatmul.mubr.f32.gmra.mrb[0].mxu0 %v1096
    %v1164 = vpop.f32.mrb[0].mxu0
    %v1165 = vadd.f32 0.0, %v1164
    %v1166 = vpop.f32.mrb[0].mxu0
    %1167 = vdwg.mxu0
    %v1168 = vadd.f32 %v1092, %v1165
    %v1169 = vtanh.pop %v1168
    %v1171 = vsel %vm211, %v1024, 0
    %1173 = vmatprep.subr.mxu0 0.0
    %1174 = vmatpush1.msra.mxu0 %v57
    %1175 = vmatprep.subr.mxu0 0.0
    %1176 = vmatpush1.msra.mxu0 %v58
    %1177 = vmatprep.subr.mxu0 0.0
    %1178 = vmatpush1.msra.mxu0 %v59
    %1179 = vmatprep.subr.mxu0 0.0
    %1180 = vmatpush1.msra.mxu0 %v60
    %1181 = vmatprep.subr.mxu0 0.0
    %1182 = vmatpush1.msra.mxu0 0.0
    %1183 = vmatprep.subr.mxu0 0.0
    %1184 = vmatpush1.msra.mxu0 0.0
    %1185 = vmatprep.subr.mxu0 0.0
    %1186 = vmatpush1.msra.mxu0 0.0
    %1187 = vmatprep.subr.mxu0 0.0
    %1188 = vmatpush1.msra.mxu0 0.0
    %1189 = vmatprep.subr.mxu0 0.0
    %1190 = vmatpush1.msra.mxu0 0.0
    %1191 = vmatprep.subr.mxu0 0.0
    %1192 = vmatpush1.msra.mxu0 0.0
    %1193 = vmatprep.subr.mxu0 0.0
    %1194 = vmatpush1.msra.mxu0 0.0
    %1195 = vmatprep.subr.mxu0 0.0
    %1196 = vmatpush1.msra.mxu0 0.0
    %1197 = vmatprep.subr.mxu0 0.0
    %1198 = vmatpush1.msra.mxu0 0.0
    %1199 = vmatprep.subr.mxu0 0.0
    %1200 = vmatpush1.msra.mxu0 0.0
    %1201 = vmatprep.subr.mxu0 0.0
    %1202 = vmatpush1.msra.mxu0 0.0
    %1203 = vmatprep.subr.mxu0 0.0
    %1204 = vmatpush1.msra.mxu0 0.0
    %1205 = vmatprep.subr.mxu0 0.0
    %1206 = vmatpush1.msra.mxu0 0.0
    %1207 = vmatprep.subr.mxu0 0.0
    %1208 = vmatpush1.msra.mxu0 0.0
    %1209 = vmatprep.subr.mxu0 0.0
    %1210 = vmatpush1.msra.mxu0 0.0
    %1211 = vmatprep.subr.mxu0 0.0
    %1212 = vmatpush1.msra.mxu0 0.0
    %1213 = vmatprep.subr.mxu0 0.0
    %1214 = vmatpush1.msra.mxu0 0.0
    %1215 = vmatprep.subr.mxu0 0.0
    %1216 = vmatpush1.msra.mxu0 0.0
    %1217 = vmatprep.subr.mxu0 0.0
    %1218 = vmatpush1.msra.mxu0 0.0
    %1219 = vmatprep.subr.mxu0 0.0
    %1220 = vmatpush1.msra.mxu0 0.0
    %1221 = vmatprep.subr.mxu0 0.0
    %1222 = vmatpush1.msra.mxu0 0.0
    %1223 = vmatprep.subr.mxu0 0.0
    %1224 = vmatpush1.msra.mxu0 0.0
    %1225 = vmatprep.subr.mxu0 0.0
    %1226 = vmatpush1.msra.mxu0 0.0
    %1227 = vmatprep.subr.mxu0 0.0
    %1228 = vmatpush1.msra.mxu0 0.0
    %1229 = vmatprep.subr.mxu0 0.0
    %1230 = vmatpush1.msra.mxu0 0.0
    %1231 = vmatprep.subr.mxu0 0.0
    %1232 = vmatpush1.msra.mxu0 0.0
    %1233 = vmatprep.subr.mxu0 0.0
    %1234 = vmatpush1.msra.mxu0 0.0
    %1235 = vmatprep.subr.mxu0 0.0
    %1236 = vmatpush1.msra.mxu0 0.0
    %1237 = vmatprep.mubr.f32.mxu0 0.0
    %1238 = vmatmul.mubr.f32.gmra.mrb[0].mxu0 %v1171
    %v1239 = vpop.f32.mrb[0].mxu0
    %v1240 = vadd.f32 0.0, %v1239
    %v1241 = vpop.f32.mrb[0].mxu0
    %1242 = vdwg.mxu0
    %v1243 = vadd.f32 %v198, %v1240
    %v1244 = vtanh.pop %v1243
    %1245 = vmatprep.subr.mxu0 0.0
    %1246 = vmatpush1.msra.mxu0 %v53
    %1247 = vmatprep.subr.mxu0 0.0
    %1248 = vmatpush1.msra.mxu0 %v54
    %1249 = vmatprep.subr.mxu0 0.0
    %1250 = vmatpush1.msra.mxu0 %v55
    %1251 = vmatprep.subr.mxu0 0.0
    %1252 = vmatpush1.msra.mxu0 %v56
    %1253 = vmatprep.subr.mxu0 0.0
    %1254 = vmatpush1.msra.mxu0 0.0
    %1255 = vmatprep.subr.mxu0 0.0
    %1256 = vmatpush1.msra.mxu0 0.0
    %1257 = vmatprep.subr.mxu0 0.0
    %1258 = vmatpush1.msra.mxu0 0.0
    %1259 = vmatprep.subr.mxu0 0.0
    %1260 = vmatpush1.msra.mxu0 0.0
    %1261 = vmatprep.subr.mxu0 0.0
    %1262 = vmatpush1.msra.mxu0 0.0
    %1263 = vmatprep.subr.mxu0 0.0
    %1264 = vmatpush1.msra.mxu0 0.0
    %1265 = vmatprep.subr.mxu0 0.0
    %1266 = vmatpush1.msra.mxu0 0.0
    %1267 = vmatprep.subr.mxu0 0.0
    %1268 = vmatpush1.msra.mxu0 0.0
    %1269 = vmatprep.subr.mxu0 0.0
    %1270 = vmatpush1.msra.mxu0 0.0
    %1271 = vmatprep.subr.mxu0 0.0
    %1272 = vmatpush1.msra.mxu0 0.0
    %1273 = vmatprep.subr.mxu0 0.0
    %1274 = vmatpush1.msra.mxu0 0.0
    %1275 = vmatprep.subr.mxu0 0.0
    %1276 = vmatpush1.msra.mxu0 0.0
    %1277 = vmatprep.subr.mxu0 0.0
    %1278 = vmatpush1.msra.mxu0 0.0
    %1279 = vmatprep.subr.mxu0 0.0
    %1280 = vmatpush1.msra.mxu0 0.0
    %1281 = vmatprep.subr.mxu0 0.0
    %1282 = vmatpush1.msra.mxu0 0.0
    %1283 = vmatprep.subr.mxu0 0.0
    %1284 = vmatpush1.msra.mxu0 0.0
    %1285 = vmatprep.subr.mxu0 0.0
    %1286 = vmatpush1.msra.mxu0 0.0
    %1287 = vmatprep.subr.mxu0 0.0
    %1288 = vmatpush1.msra.mxu0 0.0
    %1289 = vmatprep.subr.mxu0 0.0
    %1290 = vmatpush1.msra.mxu0 0.0
    %1291 = vmatprep.subr.mxu0 0.0
    %1292 = vmatpush1.msra.mxu0 0.0
    %1293 = vmatprep.subr.mxu0 0.0
    %1294 = vmatpush1.msra.mxu0 0.0
    %1295 = vmatprep.subr.mxu0 0.0
    %1296 = vmatpush1.msra.mxu0 0.0
    %1297 = vmatprep.subr.mxu0 0.0
    %1298 = vmatpush1.msra.mxu0 0.0
    %1299 = vmatprep.subr.mxu0 0.0
    %1300 = vmatpush1.msra.mxu0 0.0
    %1301 = vmatprep.subr.mxu0 0.0
    %1302 = vmatpush1.msra.mxu0 0.0
    %1303 = vmatprep.subr.mxu0 0.0
    %1304 = vmatpush1.msra.mxu0 0.0
    %1305 = vmatprep.subr.mxu0 0.0
    %1306 = vmatpush1.msra.mxu0 0.0
    %1307 = vmatprep.subr.mxu0 0.0
    %1308 = vmatpush1.msra.mxu0 0.0
    %1309 = vmatprep.mubr.f32.mxu0 0.0
    %1310 = vmatmul.mubr.f32.gmra.mrb[0].mxu0 %v1171
    %v1311 = vpop.f32.mrb[0].mxu0
    %v1312 = vadd.f32 %v366, %v1311
    %v1313 = vpop.f32.mrb[0].mxu0
    %1314 = vdwg.mxu0
    %v1316 = vsel %vm211, %v1169, 0
    %1318 = vmatprep.subr.mxu0 0.0
    %1319 = vmatpush1.msra.mxu0 %v61
    %1320 = vmatprep.subr.mxu0 0.0
    %1321 = vmatpush1.msra.mxu0 %v62
    %1322 = vmatprep.subr.mxu0 0.0
    %1323 = vmatpush1.msra.mxu0 %v63
    %1324 = vmatprep.subr.mxu0 0.0
    %1325 = vmatpush1.msra.mxu0 %v64
    %1326 = vmatprep.subr.mxu0 0.0
    %1327 = vmatpush1.msra.mxu0 0.0
    %1328 = vmatprep.subr.mxu0 0.0
    %1329 = vmatpush1.msra.mxu0 0.0
    %1330 = vmatprep.subr.mxu0 0.0
    %1331 = vmatpush1.msra.mxu0 0.0
    %1332 = vmatprep.subr.mxu0 0.0
    %1333 = vmatpush1.msra.mxu0 0.0
    %1334 = vmatprep.subr.mxu0 0.0
    %1335 = vmatpush1.msra.mxu0 0.0
    %1336 = vmatprep.subr.mxu0 0.0
    %1337 = vmatpush1.msra.mxu0 0.0
    %1338 = vmatprep.subr.mxu0 0.0
    %1339 = vmatpush1.msra.mxu0 0.0
    %1340 = vmatprep.subr.mxu0 0.0
    %1341 = vmatpush1.msra.mxu0 0.0
    %1342 = vmatprep.subr.mxu0 0.0
    %1343 = vmatpush1.msra.mxu0 0.0
    %1344 = vmatprep.subr.mxu0 0.0
    %1345 = vmatpush1.msra.mxu0 0.0
    %1346 = vmatprep.subr.mxu0 0.0
    %1347 = vmatpush1.msra.mxu0 0.0
    %1348 = vmatprep.subr.mxu0 0.0
    %1349 = vmatpush1.msra.mxu0 0.0
    %1350 = vmatprep.subr.mxu0 0.0
    %1351 = vmatpush1.msra.mxu0 0.0
    %1352 = vmatprep.subr.mxu0 0.0
    %1353 = vmatpush1.msra.mxu0 0.0
    %1354 = vmatprep.subr.mxu0 0.0
    %1355 = vmatpush1.msra.mxu0 0.0
    %1356 = vmatprep.subr.mxu0 0.0
    %1357 = vmatpush1.msra.mxu0 0.0
    %1358 = vmatprep.subr.mxu0 0.0
    %1359 = vmatpush1.msra.mxu0 0.0
    %1360 = vmatprep.subr.mxu0 0.0
    %1361 = vmatpush1.msra.mxu0 0.0
    %1362 = vmatprep.subr.mxu0 0.0
    %1363 = vmatpush1.msra.mxu0 0.0
    %1364 = vmatprep.subr.mxu0 0.0
    %1365 = vmatpush1.msra.mxu0 0.0
    %1366 = vmatprep.subr.mxu0 0.0
    %1367 = vmatpush1.msra.mxu0 0.0
    %1368 = vmatprep.subr.mxu0 0.0
    %1369 = vmatpush1.msra.mxu0 0.0
    %1370 = vmatprep.subr.mxu0 0.0
    %1371 = vmatpush1.msra.mxu0 0.0
    %1372 = vmatprep.subr.mxu0 0.0
    %1373 = vmatpush1.msra.mxu0 0.0
    %1374 = vmatprep.subr.mxu0 0.0
    %1375 = vmatpush1.msra.mxu0 0.0
    %1376 = vmatprep.subr.mxu0 0.0
    %1377 = vmatpush1.msra.mxu0 0.0
    %1378 = vmatprep.subr.mxu0 0.0
    %1379 = vmatpush1.msra.mxu0 0.0
    %1380 = vmatprep.subr.mxu0 0.0
    %1381 = vmatpush1.msra.mxu0 0.0
    %1382 = vmatprep.mubr.f32.mxu0 0.0
    %1383 = vmatmul.mubr.f32.gmra.mrb[0].mxu0 %v1316
    %v1384 = vpop.f32.mrb[0].mxu0
    %v1385 = vadd.f32 0.0, %v1384
    %v1386 = vpop.f32.mrb[0].mxu0
    %1387 = vdwg.mxu0
    %v1388 = vadd.f32 %v1312, %v1385
    %v1389 = vtanh.pop %v1388
    %v1391 = vsel %vm211, %v1244, 0
    %1393 = vmatprep.subr.mxu0 0.0
    %1394 = vmatpush1.msra.mxu0 %v57
    %1395 = vmatprep.subr.mxu0 0.0
    %1396 = vmatpush1.msra.mxu0 %v58
    %1397 = vmatprep.subr.mxu0 0.0
    %1398 = vmatpush1.msra.mxu0 %v59
    %1399 = vmatprep.subr.mxu0 0.0
    %1400 = vmatpush1.msra.mxu0 %v60
    %1401 = vmatprep.subr.mxu0 0.0
    %1402 = vmatpush1.msra.mxu0 0.0
    %1403 = vmatprep.subr.mxu0 0.0
    %1404 = vmatpush1.msra.mxu0 0.0
    %1405 = vmatprep.subr.mxu0 0.0
    %1406 = vmatpush1.msra.mxu0 0.0
    %1407 = vmatprep.subr.mxu0 0.0
    %1408 = vmatpush1.msra.mxu0 0.0
    %1409 = vmatprep.subr.mxu0 0.0
    %1410 = vmatpush1.msra.mxu0 0.0
    %1411 = vmatprep.subr.mxu0 0.0
    %1412 = vmatpush1.msra.mxu0 0.0
    %1413 = vmatprep.subr.mxu0 0.0
    %1414 = vmatpush1.msra.mxu0 0.0
    %1415 = vmatprep.subr.mxu0 0.0
    %1416 = vmatpush1.msra.mxu0 0.0
    %1417 = vmatprep.subr.mxu0 0.0
    %1418 = vmatpush1.msra.mxu0 0.0
    %1419 = vmatprep.subr.mxu0 0.0
    %1420 = vmatpush1.msra.mxu0 0.0
    %1421 = vmatprep.subr.mxu0 0.0
    %1422 = vmatpush1.msra.mxu0 0.0
    %1423 = vmatprep.subr.mxu0 0.0
    %1424 = vmatpush1.msra.mxu0 0.0
    %1425 = vmatprep.subr.mxu0 0.0
    %1426 = vmatpush1.msra.mxu0 0.0
    %1427 = vmatprep.subr.mxu0 0.0
    %1428 = vmatpush1.msra.mxu0 0.0
    %1429 = vmatprep.subr.mxu0 0.0
    %1430 = vmatpush1.msra.mxu0 0.0
    %1431 = vmatprep.subr.mxu0 0.0
    %1432 = vmatpush1.msra.mxu0 0.0
    %1433 = vmatprep.subr.mxu0 0.0
    %1434 = vmatpush1.msra.mxu0 0.0
    %1435 = vmatprep.subr.mxu0 0.0
    %1436 = vmatpush1.msra.mxu0 0.0
    %1437 = vmatprep.subr.mxu0 0.0
    %1438 = vmatpush1.msra.mxu0 0.0
    %1439 = vmatprep.subr.mxu0 0.0
    %1440 = vmatpush1.msra.mxu0 0.0
    %1441 = vmatprep.subr.mxu0 0.0
    %1442 = vmatpush1.msra.mxu0 0.0
    %1443 = vmatprep.subr.mxu0 0.0
    %1444 = vmatpush1.msra.mxu0 0.0
    %1445 = vmatprep.subr.mxu0 0.0
    %1446 = vmatpush1.msra.mxu0 0.0
    %1447 = vmatprep.subr.mxu0 0.0
    %1448 = vmatpush1.msra.mxu0 0.0
    %1449 = vmatprep.subr.mxu0 0.0
    %1450 = vmatpush1.msra.mxu0 0.0
    %1451 = vmatprep.subr.mxu0 0.0
    %1452 = vmatpush1.msra.mxu0 0.0
    %1453 = vmatprep.subr.mxu0 0.0
    %1454 = vmatpush1.msra.mxu0 0.0
    %1455 = vmatprep.subr.mxu0 0.0
    %1456 = vmatpush1.msra.mxu0 0.0
    %1457 = vmatprep.mubr.f32.mxu0 0.0
    %1458 = vmatmul.mubr.f32.gmra.mrb[0].mxu0 %v1391
    %v1459 = vpop.f32.mrb[0].mxu0
    %v1460 = vadd.f32 0.0, %v1459
    %v1461 = vpop.f32.mrb[0].mxu0
    %1462 = vdwg.mxu0
    %v1463 = vadd.f32 %v203, %v1460
    %v1464 = vtanh.pop %v1463
    %1465 = vmatprep.subr.mxu0 0.0
    %1466 = vmatpush1.msra.mxu0 %v53
    %1467 = vmatprep.subr.mxu0 0.0
    %1468 = vmatpush1.msra.mxu0 %v54
    %1469 = vmatprep.subr.mxu0 0.0
    %1470 = vmatpush1.msra.mxu0 %v55
    %1471 = vmatprep.subr.mxu0 0.0
    %1472 = vmatpush1.msra.mxu0 %v56
    %1473 = vmatprep.subr.mxu0 0.0
    %1474 = vmatpush1.msra.mxu0 0.0
    %1475 = vmatprep.subr.mxu0 0.0
    %1476 = vmatpush1.msra.mxu0 0.0
    %1477 = vmatprep.subr.mxu0 0.0
    %1478 = vmatpush1.msra.mxu0 0.0
    %1479 = vmatprep.subr.mxu0 0.0
    %1480 = vmatpush1.msra.mxu0 0.0
    %1481 = vmatprep.subr.mxu0 0.0
    %1482 = vmatpush1.msra.mxu0 0.0
    %1483 = vmatprep.subr.mxu0 0.0
    %1484 = vmatpush1.msra.mxu0 0.0
    %1485 = vmatprep.subr.mxu0 0.0
    %1486 = vmatpush1.msra.mxu0 0.0
    %1487 = vmatprep.subr.mxu0 0.0
    %1488 = vmatpush1.msra.mxu0 0.0
    %1489 = vmatprep.subr.mxu0 0.0
    %1490 = vmatpush1.msra.mxu0 0.0
    %1491 = vmatprep.subr.mxu0 0.0
    %1492 = vmatpush1.msra.mxu0 0.0
    %1493 = vmatprep.subr.mxu0 0.0
    %1494 = vmatpush1.msra.mxu0 0.0
    %1495 = vmatprep.subr.mxu0 0.0
    %1496 = vmatpush1.msra.mxu0 0.0
    %1497 = vmatprep.subr.mxu0 0.0
    %1498 = vmatpush1.msra.mxu0 0.0
    %1499 = vmatprep.subr.mxu0 0.0
    %1500 = vmatpush1.msra.mxu0 0.0
    %1501 = vmatprep.subr.mxu0 0.0
    %1502 = vmatpush1.msra.mxu0 0.0
    %1503 = vmatprep.subr.mxu0 0.0
    %1504 = vmatpush1.msra.mxu0 0.0
    %1505 = vmatprep.subr.mxu0 0.0
    %1506 = vmatpush1.msra.mxu0 0.0
    %1507 = vmatprep.subr.mxu0 0.0
    %1508 = vmatpush1.msra.mxu0 0.0
    %1509 = vmatprep.subr.mxu0 0.0
    %1510 = vmatpush1.msra.mxu0 0.0
    %1511 = vmatprep.subr.mxu0 0.0
    %1512 = vmatpush1.msra.mxu0 0.0
    %1513 = vmatprep.subr.mxu0 0.0
    %1514 = vmatpush1.msra.mxu0 0.0
    %1515 = vmatprep.subr.mxu0 0.0
    %1516 = vmatpush1.msra.mxu0 0.0
    %1517 = vmatprep.subr.mxu0 0.0
    %1518 = vmatpush1.msra.mxu0 0.0
    %1519 = vmatprep.subr.mxu0 0.0
    %1520 = vmatpush1.msra.mxu0 0.0
    %1521 = vmatprep.subr.mxu0 0.0
    %1522 = vmatpush1.msra.mxu0 0.0
    %1523 = vmatprep.subr.mxu0 0.0
    %1524 = vmatpush1.msra.mxu0 0.0
    %1525 = vmatprep.subr.mxu0 0.0
    %1526 = vmatpush1.msra.mxu0 0.0
    %1527 = vmatprep.subr.mxu0 0.0
    %1528 = vmatpush1.msra.mxu0 0.0
    %1529 = vmatprep.mubr.f32.mxu0 0.0
    %1530 = vmatmul.mubr.f32.gmra.mrb[0].mxu0 %v1391
    %v1531 = vpop.f32.mrb[0].mxu0
    %v1532 = vadd.f32 %v366, %v1531
    %v1533 = vpop.f32.mrb[0].mxu0
    %1534 = vdwg.mxu0
    %v1536 = vsel %vm211, %v1389, 0
    %1538 = vmatprep.subr.mxu0 0.0
    %1539 = vmatpush1.msra.mxu0 %v61
    %1540 = vmatprep.subr.mxu0 0.0
    %1541 = vmatpush1.msra.mxu0 %v62
    %1542 = vmatprep.subr.mxu0 0.0
    %1543 = vmatpush1.msra.mxu0 %v63
    %1544 = vmatprep.subr.mxu0 0.0
    %1545 = vmatpush1.msra.mxu0 %v64
    %1546 = vmatprep.subr.mxu0 0.0
    %1547 = vmatpush1.msra.mxu0 0.0
    %1548 = vmatprep.subr.mxu0 0.0
    %1549 = vmatpush1.msra.mxu0 0.0
    %1550 = vmatprep.subr.mxu0 0.0
    %1551 = vmatpush1.msra.mxu0 0.0
    %1552 = vmatprep.subr.mxu0 0.0
    %1553 = vmatpush1.msra.mxu0 0.0
    %1554 = vmatprep.subr.mxu0 0.0
    %1555 = vmatpush1.msra.mxu0 0.0
    %1556 = vmatprep.subr.mxu0 0.0
    %1557 = vmatpush1.msra.mxu0 0.0
    %1558 = vmatprep.subr.mxu0 0.0
    %1559 = vmatpush1.msra.mxu0 0.0
    %1560 = vmatprep.subr.mxu0 0.0
    %1561 = vmatpush1.msra.mxu0 0.0
    %1562 = vmatprep.subr.mxu0 0.0
    %1563 = vmatpush1.msra.mxu0 0.0
    %1564 = vmatprep.subr.mxu0 0.0
    %1565 = vmatpush1.msra.mxu0 0.0
    %1566 = vmatprep.subr.mxu0 0.0
    %1567 = vmatpush1.msra.mxu0 0.0
    %1568 = vmatprep.subr.mxu0 0.0
    %1569 = vmatpush1.msra.mxu0 0.0
    %1570 = vmatprep.subr.mxu0 0.0
    %1571 = vmatpush1.msra.mxu0 0.0
    %1572 = vmatprep.subr.mxu0 0.0
    %1573 = vmatpush1.msra.mxu0 0.0
    %1574 = vmatprep.subr.mxu0 0.0
    %1575 = vmatpush1.msra.mxu0 0.0
    %1576 = vmatprep.subr.mxu0 0.0
    %1577 = vmatpush1.msra.mxu0 0.0
    %1578 = vmatprep.subr.mxu0 0.0
    %1579 = vmatpush1.msra.mxu0 0.0
    %1580 = vmatprep.subr.mxu0 0.0
    %1581 = vmatpush1.msra.mxu0 0.0
    %1582 = vmatprep.subr.mxu0 0.0
    %1583 = vmatpush1.msra.mxu0 0.0
    %1584 = vmatprep.subr.mxu0 0.0
    %1585 = vmatpush1.msra.mxu0 0.0
    %1586 = vmatprep.subr.mxu0 0.0
    %1587 = vmatpush1.msra.mxu0 0.0
    %1588 = vmatprep.subr.mxu0 0.0
    %1589 = vmatpush1.msra.mxu0 0.0
    %1590 = vmatprep.subr.mxu0 0.0
    %1591 = vmatpush1.msra.mxu0 0.0
    %1592 = vmatprep.subr.mxu0 0.0
    %1593 = vmatpush1.msra.mxu0 0.0
    %1594 = vmatprep.subr.mxu0 0.0
    %1595 = vmatpush1.msra.mxu0 0.0
    %1596 = vmatprep.subr.mxu0 0.0
    %1597 = vmatpush1.msra.mxu0 0.0
    %1598 = vmatprep.subr.mxu0 0.0
    %1599 = vmatpush1.msra.mxu0 0.0
    %1600 = vmatprep.subr.mxu0 0.0
    %1601 = vmatpush1.msra.mxu0 0.0
    %1602 = vmatprep.mubr.f32.mxu0 0.0
    %1603 = vmatmul.mubr.f32.gmra.mrb[0].mxu0 %v1536
    %v1604 = vpop.f32.mrb[0].mxu0
    %v1605 = vadd.f32 0.0, %v1604
    %v1606 = vpop.f32.mrb[0].mxu0
    %1607 = vdwg.mxu0
    %v1608 = vadd.f32 %v1532, %v1605
    %v1609 = vtanh.pop %v1608
    %v1611 = vsel %vm211, %v1464, 0
    %1613 = vmatprep.subr.mxu0 0.0
    %1614 = vmatpush1.msra.mxu0 %v57
    %1615 = vmatprep.subr.mxu0 0.0
    %1616 = vmatpush1.msra.mxu0 %v58
    %1617 = vmatprep.subr.mxu0 0.0
    %1618 = vmatpush1.msra.mxu0 %v59
    %1619 = vmatprep.subr.mxu0 0.0
    %1620 = vmatpush1.msra.mxu0 %v60
    %1621 = vmatprep.subr.mxu0 0.0
    %1622 = vmatpush1.msra.mxu0 0.0
    %1623 = vmatprep.subr.mxu0 0.0
    %1624 = vmatpush1.msra.mxu0 0.0
    %1625 = vmatprep.subr.mxu0 0.0
    %1626 = vmatpush1.msra.mxu0 0.0
    %1627 = vmatprep.subr.mxu0 0.0
    %1628 = vmatpush1.msra.mxu0 0.0
    %1629 = vmatprep.subr.mxu0 0.0
    %1630 = vmatpush1.msra.mxu0 0.0
    %1631 = vmatprep.subr.mxu0 0.0
    %1632 = vmatpush1.msra.mxu0 0.0
    %1633 = vmatprep.subr.mxu0 0.0
    %1634 = vmatpush1.msra.mxu0 0.0
    %1635 = vmatprep.subr.mxu0 0.0
    %1636 = vmatpush1.msra.mxu0 0.0
    %1637 = vmatprep.subr.mxu0 0.0
    %1638 = vmatpush1.msra.mxu0 0.0
    %1639 = vmatprep.subr.mxu0 0.0
    %1640 = vmatpush1.msra.mxu0 0.0
    %1641 = vmatprep.subr.mxu0 0.0
    %1642 = vmatpush1.msra.mxu0 0.0
    %1643 = vmatprep.subr.mxu0 0.0
    %1644 = vmatpush1.msra.mxu0 0.0
    %1645 = vmatprep.subr.mxu0 0.0
    %1646 = vmatpush1.msra.mxu0 0.0
    %1647 = vmatprep.subr.mxu0 0.0
    %1648 = vmatpush1.msra.mxu0 0.0
    %1649 = vmatprep.subr.mxu0 0.0
    %1650 = vmatpush1.msra.mxu0 0.0
    %1651 = vmatprep.subr.mxu0 0.0
    %1652 = vmatpush1.msra.mxu0 0.0
    %1653 = vmatprep.subr.mxu0 0.0
    %1654 = vmatpush1.msra.mxu0 0.0
    %1655 = vmatprep.subr.mxu0 0.0
    %1656 = vmatpush1.msra.mxu0 0.0
    %1657 = vmatprep.subr.mxu0 0.0
    %1658 = vmatpush1.msra.mxu0 0.0
    %1659 = vmatprep.subr.mxu0 0.0
    %1660 = vmatpush1.msra.mxu0 0.0
    %1661 = vmatprep.subr.mxu0 0.0
    %1662 = vmatpush1.msra.mxu0 0.0
    %1663 = vmatprep.subr.mxu0 0.0
    %1664 = vmatpush1.msra.mxu0 0.0
    %1665 = vmatprep.subr.mxu0 0.0
    %1666 = vmatpush1.msra.mxu0 0.0
    %1667 = vmatprep.subr.mxu0 0.0
    %1668 = vmatpush1.msra.mxu0 0.0
    %1669 = vmatprep.subr.mxu0 0.0
    %1670 = vmatpush1.msra.mxu0 0.0
    %1671 = vmatprep.subr.mxu0 0.0
    %1672 = vmatpush1.msra.mxu0 0.0
    %1673 = vmatprep.subr.mxu0 0.0
    %1674 = vmatpush1.msra.mxu0 0.0
    %1675 = vmatprep.subr.mxu0 0.0
    %1676 = vmatpush1.msra.mxu0 0.0
    %1677 = vmatprep.mubr.f32.mxu0 0.0
    %1678 = vmatmul.mubr.f32.gmra.mrb[0].mxu0 %v1611
    %v1679 = vpop.f32.mrb[0].mxu0
    %v1680 = vadd.f32 0.0, %v1679
    %v1681 = vpop.f32.mrb[0].mxu0
    %1682 = vdwg.mxu0
    %v1683 = vadd.f32 %v208, %v1680
    %v1684 = vtanh.pop %v1683
    %1685 = vmatprep.subr.mxu0 0.0
    %1686 = vmatpush1.msra.mxu0 %v53
    %1687 = vmatprep.subr.mxu0 0.0
    %1688 = vmatpush1.msra.mxu0 %v54
    %1689 = vmatprep.subr.mxu0 0.0
    %1690 = vmatpush1.msra.mxu0 %v55
    %1691 = vmatprep.subr.mxu0 0.0
    %1692 = vmatpush1.msra.mxu0 %v56
    %1693 = vmatprep.subr.mxu0 0.0
    %1694 = vmatpush1.msra.mxu0 0.0
    %1695 = vmatprep.subr.mxu0 0.0
    %1696 = vmatpush1.msra.mxu0 0.0
    %1697 = vmatprep.subr.mxu0 0.0
    %1698 = vmatpush1.msra.mxu0 0.0
    %1699 = vmatprep.subr.mxu0 0.0
    %1700 = vmatpush1.msra.mxu0 0.0
    %1701 = vmatprep.subr.mxu0 0.0
    %1702 = vmatpush1.msra.mxu0 0.0
    %1703 = vmatprep.subr.mxu0 0.0
    %1704 = vmatpush1.msra.mxu0 0.0
    %1705 = vmatprep.subr.mxu0 0.0
    %1706 = vmatpush1.msra.mxu0 0.0
    %1707 = vmatprep.subr.mxu0 0.0
    %1708 = vmatpush1.msra.mxu0 0.0
    %1709 = vmatprep.subr.mxu0 0.0
    %1710 = vmatpush1.msra.mxu0 0.0
    %1711 = vmatprep.subr.mxu0 0.0
    %1712 = vmatpush1.msra.mxu0 0.0
    %1713 = vmatprep.subr.mxu0 0.0
    %1714 = vmatpush1.msra.mxu0 0.0
    %1715 = vmatprep.subr.mxu0 0.0
    %1716 = vmatpush1.msra.mxu0 0.0
    %1717 = vmatprep.subr.mxu0 0.0
    %1718 = vmatpush1.msra.mxu0 0.0
    %1719 = vmatprep.subr.mxu0 0.0
    %1720 = vmatpush1.msra.mxu0 0.0
    %1721 = vmatprep.subr.mxu0 0.0
    %1722 = vmatpush1.msra.mxu0 0.0
    %1723 = vmatprep.subr.mxu0 0.0
    %1724 = vmatpush1.msra.mxu0 0.0
    %1725 = vmatprep.subr.mxu0 0.0
    %1726 = vmatpush1.msra.mxu0 0.0
    %1727 = vmatprep.subr.mxu0 0.0
    %1728 = vmatpush1.msra.mxu0 0.0
    %1729 = vmatprep.subr.mxu0 0.0
    %1730 = vmatpush1.msra.mxu0 0.0
    %1731 = vmatprep.subr.mxu0 0.0
    %1732 = vmatpush1.msra.mxu0 0.0
    %1733 = vmatprep.subr.mxu0 0.0
    %1734 = vmatpush1.msra.mxu0 0.0
    %1735 = vmatprep.subr.mxu0 0.0
    %1736 = vmatpush1.msra.mxu0 0.0
    %1737 = vmatprep.subr.mxu0 0.0
    %1738 = vmatpush1.msra.mxu0 0.0
    %1739 = vmatprep.subr.mxu0 0.0
    %1740 = vmatpush1.msra.mxu0 0.0
    %1741 = vmatprep.subr.mxu0 0.0
    %1742 = vmatpush1.msra.mxu0 0.0
    %1743 = vmatprep.subr.mxu0 0.0
    %1744 = vmatpush1.msra.mxu0 0.0
    %1745 = vmatprep.subr.mxu0 0.0
    %1746 = vmatpush1.msra.mxu0 0.0
    %1747 = vmatprep.subr.mxu0 0.0
    %1748 = vmatpush1.msra.mxu0 0.0
    %1749 = vmatprep.mubr.f32.mxu0 0.0
    %1750 = vmatmul.mubr.f32.gmra.mrb[0].mxu0 %v1611
    %v1751 = vpop.f32.mrb[0].mxu0
    %v1752 = vadd.f32 %v366, %v1751
    %v1753 = vpop.f32.mrb[0].mxu0
    %1754 = vdwg.mxu0
    %v1756 = vsel %vm211, %v1609, 0
    %1758 = vmatprep.subr.mxu0 0.0
    %1759 = vmatpush1.msra.mxu0 %v61
    %1760 = vmatprep.subr.mxu0 0.0
    %1761 = vmatpush1.msra.mxu0 %v62
    %1762 = vmatprep.subr.mxu0 0.0
    %1763 = vmatpush1.msra.mxu0 %v63
    %1764 = vmatprep.subr.mxu0 0.0
    %1765 = vmatpush1.msra.mxu0 %v64
    %1766 = vmatprep.subr.mxu0 0.0
    %1767 = vmatpush1.msra.mxu0 0.0
    %1768 = vmatprep.subr.mxu0 0.0
    %1769 = vmatpush1.msra.mxu0 0.0
    %1770 = vmatprep.subr.mxu0 0.0
    %1771 = vmatpush1.msra.mxu0 0.0
    %1772 = vmatprep.subr.mxu0 0.0
    %1773 = vmatpush1.msra.mxu0 0.0
    %1774 = vmatprep.subr.mxu0 0.0
    %1775 = vmatpush1.msra.mxu0 0.0
    %1776 = vmatprep.subr.mxu0 0.0
    %1777 = vmatpush1.msra.mxu0 0.0
    %1778 = vmatprep.subr.mxu0 0.0
    %1779 = vmatpush1.msra.mxu0 0.0
    %1780 = vmatprep.subr.mxu0 0.0
    %1781 = vmatpush1.msra.mxu0 0.0
    %1782 = vmatprep.subr.mxu0 0.0
    %1783 = vmatpush1.msra.mxu0 0.0
    %1784 = vmatprep.subr.mxu0 0.0
    %1785 = vmatpush1.msra.mxu0 0.0
    %1786 = vmatprep.subr.mxu0 0.0
    %1787 = vmatpush1.msra.mxu0 0.0
    %1788 = vmatprep.subr.mxu0 0.0
    %1789 = vmatpush1.msra.mxu0 0.0
    %1790 = vmatprep.subr.mxu0 0.0
    %1791 = vmatpush1.msra.mxu0 0.0
    %1792 = vmatprep.subr.mxu0 0.0
    %1793 = vmatpush1.msra.mxu0 0.0
    %1794 = vmatprep.subr.mxu0 0.0
    %1795 = vmatpush1.msra.mxu0 0.0
    %1796 = vmatprep.subr.mxu0 0.0
    %1797 = vmatpush1.msra.mxu0 0.0
    %1798 = vmatprep.subr.mxu0 0.0
    %1799 = vmatpush1.msra.mxu0 0.0
    %1800 = vmatprep.subr.mxu0 0.0
    %1801 = vmatpush1.msra.mxu0 0.0
    %1802 = vmatprep.subr.mxu0 0.0
    %1803 = vmatpush1.msra.mxu0 0.0
    %1804 = vmatprep.subr.mxu0 0.0
    %1805 = vmatpush1.msra.mxu0 0.0
    %1806 = vmatprep.subr.mxu0 0.0
    %1807 = vmatpush1.msra.mxu0 0.0
    %1808 = vmatprep.subr.mxu0 0.0
    %1809 = vmatpush1.msra.mxu0 0.0
    %1810 = vmatprep.subr.mxu0 0.0
    %1811 = vmatpush1.msra.mxu0 0.0
    %1812 = vmatprep.subr.mxu0 0.0
    %1813 = vmatpush1.msra.mxu0 0.0
    %1814 = vmatprep.subr.mxu0 0.0
    %1815 = vmatpush1.msra.mxu0 0.0
    %1816 = vmatprep.subr.mxu0 0.0
    %1817 = vmatpush1.msra.mxu0 0.0
    %1818 = vmatprep.subr.mxu0 0.0
    %1819 = vmatpush1.msra.mxu0 0.0
    %1820 = vmatprep.subr.mxu0 0.0
    %1821 = vmatpush1.msra.mxu0 0.0
    %1822 = vmatprep.mubr.f32.mxu0 0.0
    %1823 = vmatmul.mubr.f32.gmra.mrb[0].mxu0 %v1756
    %v1824 = vpop.f32.mrb[0].mxu0
    %v1825 = vadd.f32 0.0, %v1824
    %v1826 = vpop.f32.mrb[0].mxu0
    %1827 = vdwg.mxu0
    %v1828 = vadd.f32 %v1752, %v1825
    %v1829 = vtanh.pop %v1828
    %v1831 = vsel %vm211, %v1684, 0
    %1833 = vmatprep.subr.mxu0 0.0
    %1834 = vmatpush1.msra.mxu0 %v53
    %1835 = vmatprep.subr.mxu0 0.0
    %1836 = vmatpush1.msra.mxu0 %v54
    %1837 = vmatprep.subr.mxu0 0.0
    %1838 = vmatpush1.msra.mxu0 %v55
    %1839 = vmatprep.subr.mxu0 0.0
    %1840 = vmatpush1.msra.mxu0 %v56
    %1841 = vmatprep.subr.mxu0 0.0
    %1842 = vmatpush1.msra.mxu0 0.0
    %1843 = vmatprep.subr.mxu0 0.0
    %1844 = vmatpush1.msra.mxu0 0.0
    %1845 = vmatprep.subr.mxu0 0.0
    %1846 = vmatpush1.msra.mxu0 0.0
    %1847 = vmatprep.subr.mxu0 0.0
    %1848 = vmatpush1.msra.mxu0 0.0
    %1849 = vmatprep.subr.mxu0 0.0
    %1850 = vmatpush1.msra.mxu0 0.0
    %1851 = vmatprep.subr.mxu0 0.0
    %1852 = vmatpush1.msra.mxu0 0.0
    %1853 = vmatprep.subr.mxu0 0.0
    %1854 = vmatpush1.msra.mxu0 0.0
    %1855 = vmatprep.subr.mxu0 0.0
    %1856 = vmatpush1.msra.mxu0 0.0
    %1857 = vmatprep.subr.mxu0 0.0
    %1858 = vmatpush1.msra.mxu0 0.0
    %1859 = vmatprep.subr.mxu0 0.0
    %1860 = vmatpush1.msra.mxu0 0.0
    %1861 = vmatprep.subr.mxu0 0.0
    %1862 = vmatpush1.msra.mxu0 0.0
    %1863 = vmatprep.subr.mxu0 0.0
    %1864 = vmatpush1.msra.mxu0 0.0
    %1865 = vmatprep.subr.mxu0 0.0
    %1866 = vmatpush1.msra.mxu0 0.0
    %1867 = vmatprep.subr.mxu0 0.0
    %1868 = vmatpush1.msra.mxu0 0.0
    %1869 = vmatprep.subr.mxu0 0.0
    %1870 = vmatpush1.msra.mxu0 0.0
    %1871 = vmatprep.subr.mxu0 0.0
    %1872 = vmatpush1.msra.mxu0 0.0
    %1873 = vmatprep.subr.mxu0 0.0
    %1874 = vmatpush1.msra.mxu0 0.0
    %1875 = vmatprep.subr.mxu0 0.0
    %1876 = vmatpush1.msra.mxu0 0.0
    %1877 = vmatprep.subr.mxu0 0.0
    %1878 = vmatpush1.msra.mxu0 0.0
    %1879 = vmatprep.subr.mxu0 0.0
    %1880 = vmatpush1.msra.mxu0 0.0
    %1881 = vmatprep.subr.mxu0 0.0
    %1882 = vmatpush1.msra.mxu0 0.0
    %1883 = vmatprep.subr.mxu0 0.0
    %1884 = vmatpush1.msra.mxu0 0.0
    %1885 = vmatprep.subr.mxu0 0.0
    %1886 = vmatpush1.msra.mxu0 0.0
    %1887 = vmatprep.subr.mxu0 0.0
    %1888 = vmatpush1.msra.mxu0 0.0
    %1889 = vmatprep.subr.mxu0 0.0
    %1890 = vmatpush1.msra.mxu0 0.0
    %1891 = vmatprep.subr.mxu0 0.0
    %1892 = vmatpush1.msra.mxu0 0.0
    %1893 = vmatprep.subr.mxu0 0.0
    %1894 = vmatpush1.msra.mxu0 0.0
    %1895 = vmatprep.subr.mxu0 0.0
    %1896 = vmatpush1.msra.mxu0 0.0
    %1897 = vmatprep.mubr.f32.mxu0 0.0
    %1898 = vmatmul.mubr.f32.gmra.mrb[0].mxu0 %v1831
    %v1899 = vpop.f32.mrb[0].mxu0
    %v1900 = vadd.f32 %v366, %v1899
    %v1901 = vpop.f32.mrb[0].mxu0
    %1902 = vdwg.mxu0
    %v1904 = vsel %vm211, %v1829, 0
    %1906 = vmatprep.subr.mxu0 0.0
    %1907 = vmatpush1.msra.mxu0 %v61
    %1908 = vmatprep.subr.mxu0 0.0
    %1909 = vmatpush1.msra.mxu0 %v62
    %1910 = vmatprep.subr.mxu0 0.0
    %1911 = vmatpush1.msra.mxu0 %v63
    %1912 = vmatprep.subr.mxu0 0.0
    %1913 = vmatpush1.msra.mxu0 %v64
    %1914 = vmatprep.subr.mxu0 0.0
    %1915 = vmatpush1.msra.mxu0 0.0
    %1916 = vmatprep.subr.mxu0 0.0
    %1917 = vmatpush1.msra.mxu0 0.0
    %1918 = vmatprep.subr.mxu0 0.0
    %1919 = vmatpush1.msra.mxu0 0.0
    %1920 = vmatprep.subr.mxu0 0.0
    %1921 = vmatpush1.msra.mxu0 0.0
    %1922 = vmatprep.subr.mxu0 0.0
    %1923 = vmatpush1.msra.mxu0 0.0
    %1924 = vmatprep.subr.mxu0 0.0
    %1925 = vmatpush1.msra.mxu0 0.0
    %1926 = vmatprep.subr.mxu0 0.0
    %1927 = vmatpush1.msra.mxu0 0.0
    %1928 = vmatprep.subr.mxu0 0.0
    %1929 = vmatpush1.msra.mxu0 0.0
    %1930 = vmatprep.subr.mxu0 0.0
    %1931 = vmatpush1.msra.mxu0 0.0
    %1932 = vmatprep.subr.mxu0 0.0
    %1933 = vmatpush1.msra.mxu0 0.0
    %1934 = vmatprep.subr.mxu0 0.0
    %1935 = vmatpush1.msra.mxu0 0.0
    %1936 = vmatprep.subr.mxu0 0.0
    %1937 = vmatpush1.msra.mxu0 0.0
    %1938 = vmatprep.subr.mxu0 0.0
    %1939 = vmatpush1.msra.mxu0 0.0
    %1940 = vmatprep.subr.mxu0 0.0
    %1941 = vmatpush1.msra.mxu0 0.0
    %1942 = vmatprep.subr.mxu0 0.0
    %1943 = vmatpush1.msra.mxu0 0.0
    %1944 = vmatprep.subr.mxu0 0.0
    %1945 = vmatpush1.msra.mxu0 0.0
    %1946 = vmatprep.subr.mxu0 0.0
    %1947 = vmatpush1.msra.mxu0 0.0
    %1948 = vmatprep.subr.mxu0 0.0
    %1949 = vmatpush1.msra.mxu0 0.0
    %1950 = vmatprep.subr.mxu0 0.0
    %1951 = vmatpush1.msra.mxu0 0.0
    %1952 = vmatprep.subr.mxu0 0.0
    %1953 = vmatpush1.msra.mxu0 0.0
    %1954 = vmatprep.subr.mxu0 0.0
    %1955 = vmatpush1.msra.mxu0 0.0
    %1956 = vmatprep.subr.mxu0 0.0
    %1957 = vmatpush1.msra.mxu0 0.0
    %1958 = vmatprep.subr.mxu0 0.0
    %1959 = vmatpush1.msra.mxu0 0.0
    %1960 = vmatprep.subr.mxu0 0.0
    %1961 = vmatpush1.msra.mxu0 0.0
    %1962 = vmatprep.subr.mxu0 0.0
    %1963 = vmatpush1.msra.mxu0 0.0
    %1964 = vmatprep.subr.mxu0 0.0
    %1965 = vmatpush1.msra.mxu0 0.0
    %1966 = vmatprep.subr.mxu0 0.0
    %1967 = vmatpush1.msra.mxu0 0.0
    %1968 = vmatprep.subr.mxu0 0.0
    %1969 = vmatpush1.msra.mxu0 0.0
    %1970 = vmatprep.mubr.f32.mxu0 0.0
    %1971 = vmatmul.mubr.f32.gmra.mrb[0].mxu0 %v1904
    %v1972 = vpop.f32.mrb[0].mxu0
    %v1973 = vadd.f32 0.0, %v1972
    %v1974 = vpop.f32.mrb[0].mxu0
    %1975 = vdwg.mxu0
    %v1976 = vadd.f32 %v1900, %v1973
    %v1977 = vtanh.pop %v1976
    %v1979 = vlaneseq
    %v1980 = vshrl.u32 %v1979, 7
    %v1981 = vsub.s32 0, %v1980
    %v1982 = vrot.slane %v50, %v1981
    %v1985 = vsel %vm211, %v1977, 0
    %1987 = vmatprep.subr.mxu0 0.0
    %1988 = vmatpush1.msra.mxu0 %v46
    %1989 = vmatprep.subr.mxu0 0.0
    %1990 = vmatpush1.msra.mxu0 %v47
    %1991 = vmatprep.subr.mxu0 0.0
    %1992 = vmatpush1.msra.mxu0 %v48
    %1993 = vmatprep.subr.mxu0 0.0
    %1994 = vmatpush1.msra.mxu0 %v49
    %1995 = vmatprep.subr.mxu0 0.0
    %1996 = vmatpush1.msra.mxu0 0.0
    %1997 = vmatprep.subr.mxu0 0.0
    %1998 = vmatpush1.msra.mxu0 0.0
    %1999 = vmatprep.subr.mxu0 0.0
    %2000 = vmatpush1.msra.mxu0 0.0
    %2001 = vmatprep.subr.mxu0 0.0
    %2002 = vmatpush1.msra.mxu0 0.0
    %2003 = vmatprep.subr.mxu0 0.0
    %2004 = vmatpush1.msra.mxu0 0.0
    %2005 = vmatprep.subr.mxu0 0.0
    %2006 = vmatpush1.msra.mxu0 0.0
    %2007 = vmatprep.subr.mxu0 0.0
    %2008 = vmatpush1.msra.mxu0 0.0
    %2009 = vmatprep.subr.mxu0 0.0
    %2010 = vmatpush1.msra.mxu0 0.0
    %2011 = vmatprep.subr.mxu0 0.0
    %2012 = vmatpush1.msra.mxu0 0.0
    %2013 = vmatprep.subr.mxu0 0.0
    %2014 = vmatpush1.msra.mxu0 0.0
    %2015 = vmatprep.subr.mxu0 0.0
    %2016 = vmatpush1.msra.mxu0 0.0
    %2017 = vmatprep.subr.mxu0 0.0
    %2018 = vmatpush1.msra.mxu0 0.0
    %2019 = vmatprep.subr.mxu0 0.0
    %2020 = vmatpush1.msra.mxu0 0.0
    %2021 = vmatprep.subr.mxu0 0.0
    %2022 = vmatpush1.msra.mxu0 0.0
    %2023 = vmatprep.subr.mxu0 0.0
    %2024 = vmatpush1.msra.mxu0 0.0
    %2025 = vmatprep.subr.mxu0 0.0
    %2026 = vmatpush1.msra.mxu0 0.0
    %2027 = vmatprep.subr.mxu0 0.0
    %2028 = vmatpush1.msra.mxu0 0.0
    %2029 = vmatprep.subr.mxu0 0.0
    %2030 = vmatpush1.msra.mxu0 0.0
    %2031 = vmatprep.subr.mxu0 0.0
    %2032 = vmatpush1.msra.mxu0 0.0
    %2033 = vmatprep.subr.mxu0 0.0
    %2034 = vmatpush1.msra.mxu0 0.0
    %2035 = vmatprep.subr.mxu0 0.0
    %2036 = vmatpush1.msra.mxu0 0.0
    %2037 = vmatprep.subr.mxu0 0.0
    %2038 = vmatpush1.msra.mxu0 0.0
    %2039 = vmatprep.subr.mxu0 0.0
    %2040 = vmatpush1.msra.mxu0 0.0
    %2041 = vmatprep.subr.mxu0 0.0
    %2042 = vmatpush1.msra.mxu0 0.0
    %2043 = vmatprep.subr.mxu0 0.0
    %2044 = vmatpush1.msra.mxu0 0.0
    %2045 = vmatprep.subr.mxu0 0.0
    %2046 = vmatpush1.msra.mxu0 0.0
    %2047 = vmatprep.subr.mxu0 0.0
    %2048 = vmatpush1.msra.mxu0 0.0
    %2049 = vmatprep.subr.mxu0 0.0
    %2050 = vmatpush1.msra.mxu0 0.0
    %2051 = vmatprep.mubr.f32.mxu0 0.0
    %2052 = vmatmul.mubr.f32.gmra.mrb[0].mxu0 %v1985
    %v2053 = vpop.f32.mrb[0].mxu0
    %v2054 = vadd.f32 %v1982, %v2053
    %v2055 = vpop.f32.mrb[0].mxu0
    %2056 = vdwg.mxu0
    %2057 = vst [vmem:[%s9] sm:$0xff] %v2054
    // Predicated region
    $region42: #{_rnn_forward_impl.1} parent=1 // pred_check
      _
    $region43: #{_rnn_forward_impl.1} parent=1 // pred_check_branch
      %2059 = sbr.rel (0) target = $region45
    $region44: #{_rnn_forward_impl.1} parent=1 // pred_region
      _
    $region45: #{_rnn_forward_impl.1} parent=1 // pred_fallthru
      _
    // Predicated region
    $region46: #{_rnn_forward_impl.1} parent=1 // pred_check
      _
    $region47: #{_rnn_forward_impl.1} parent=1 // pred_check_branch
      %2061 = sbr.rel (0) target = $region49
    $region48: #{_rnn_forward_impl.1} parent=1 // pred_region
      _
    $region49: #{_rnn_forward_impl.1} parent=1 // pred_fallthru
      _
    %2062 = vsyncpa [#allocation3], 1

</llo_original>
